<compile_context>
chip_gen: v5e
topology: v5e:2x2
jax: 0.10.0
libtpu: 0.0.40
codegen_flags: <defaults>
</compile_context>

<pallas_src>
import math

import jax
import jax.numpy as jnp
from jax.experimental import pallas as pl
from jax.experimental.pallas import tpu as pltpu

# Set to jnp.bfloat16 on v6e/v7x to halve weight DMA bytes for the big input
# projection (accumulation stays f32).  Kept f32 here so the numerical check
# against the plain-JAX reference stays tight and because v5e has no bf16 VPU.
MXU_DTYPE = jnp.float32
BN_EPS = 1e-5


def _round_up(a, b):
    return (a + b - 1) // b * b


# ---------------------------------------------------------------------------
# Kernel 1: fused (BatchNorm-folded) input projection for both directions.
# ---------------------------------------------------------------------------
def _proj_kernel(x_ref, w_ref, b_ref, o_ref):
    acc = jnp.dot(x_ref[...], w_ref[...], preferred_element_type=jnp.float32)
    o_ref[...] = (acc + b_ref[...].astype(jnp.float32)).astype(o_ref.dtype)


def input_projection(x2d, w, b):
    """x2d: [M, K] rows, w: [K, F] (pre-transposed), b: [F].  Returns [M, F] f32."""
    M, K = x2d.shape
    K2, F = w.shape
    assert K == K2 and F % 128 == 0

    # Row (M) tiling: sublane-aligned tiles, padded with zero rows.
    M_pad = _round_up(M, 8)
    TM = 256 if M_pad >= 256 else M_pad
    M_pad = _round_up(M, TM)
    if M_pad != M:
        x2d = jnp.pad(x2d, ((0, M_pad - M), (0, 0)))

    # Feature (output) tiling: lane-dense, keeps weight tiles a few MiB
    # (fits v7x's smaller VMEM with double buffering).
    if F % 512 == 0:
        TN = 512
    elif F % 256 == 0:
        TN = 256
    else:
        TN = 128

    # Feature tiles outer, row tiles inner -> the weight block is revisited
    # (stays resident in VMEM) across the inner row sweep.
    grid = (F // TN, M_pad // TM)

    out = pl.pallas_call(
        _proj_kernel,
        out_shape=jax.ShapeDtypeStruct((M_pad, F), jnp.float32),
        grid_spec=pltpu.PrefetchScalarGridSpec(
            num_scalar_prefetch=0,
            grid=grid,
            in_specs=[
                pl.BlockSpec((TM, K), lambda j, i: (i, 0)),   # activations
                pl.BlockSpec((K, TN), lambda j, i: (0, j)),   # weight (resident)
                pl.BlockSpec((1, TN), lambda j, i: (0, j)),   # bias
            ],
            out_specs=pl.BlockSpec((TM, TN), lambda j, i: (i, j)),
        ),
        compiler_params=pltpu.CompilerParams(
            dimension_semantics=("parallel", "parallel"),
            vmem_limit_bytes=32 * 1024 * 1024,
        ),
    )(x2d.astype(MXU_DTYPE), w.astype(MXU_DTYPE), b.reshape(1, F))
    return out[:M]


# ---------------------------------------------------------------------------
# Kernel 2: bidirectional LSTM recurrence with length masking.
# ---------------------------------------------------------------------------
def _lstm_recurrence_kernel(len_ref, gf_ref, gb_ref, whf_ref, whb_ref,
                            of_ref, ob_ref, hf, cf, hb, cb):
    t = pl.program_id(0)
    T = pl.num_programs(0)
    H = hf.shape[1]

    @pl.when(t == 0)
    def _():
        hf[...] = jnp.zeros_like(hf)
        cf[...] = jnp.zeros_like(cf)
        hb[...] = jnp.zeros_like(hb)
        cb[...] = jnp.zeros_like(cb)

    lengths = len_ref[...]                      # [N, 1] int32

    def cell(pre, h_prev, c_prev, whh_t):
        g = pre + jnp.dot(h_prev, whh_t, preferred_element_type=jnp.float32)
        i = jax.nn.sigmoid(g[:, 0 * H:1 * H])   # PyTorch gate order: i, f, g, o
        f = jax.nn.sigmoid(g[:, 1 * H:2 * H])
        gg = jnp.tanh(g[:, 2 * H:3 * H])
        o = jax.nn.sigmoid(g[:, 3 * H:4 * H])
        c_new = f * c_prev + i * gg
        h_new = o * jnp.tanh(c_new)
        return h_new, c_new

    # Forward direction: processes time index t.
    valid_f = t < lengths                       # [N, 1] bool
    h_new, c_new = cell(gf_ref[0], hf[...], cf[...], whf_ref[...])
    hf[...] = jnp.where(valid_f, h_new, hf[...])
    cf[...] = jnp.where(valid_f, c_new, cf[...])
    of_ref[0] = jnp.where(valid_f, h_new, 0.0).astype(of_ref.dtype)

    # Backward direction: processes time index T-1-t (blocks selected by the
    # index_map).  The state only starts updating once (T-1-t) < length, which
    # reproduces pack_padded_sequence semantics for the reverse pass.
    valid_b = (T - 1 - t) < lengths
    h_new, c_new = cell(gb_ref[0], hb[...], cb[...], whb_ref[...])
    hb[...] = jnp.where(valid_b, h_new, hb[...])
    cb[...] = jnp.where(valid_b, c_new, cb[...])
    ob_ref[0] = jnp.where(valid_b, h_new, 0.0).astype(ob_ref.dtype)


def lstm_bidir(gates_f, gates_b, whh_f_t, whh_b_t, lengths_2d):
    T, N, G = gates_f.shape
    H = G // 4
    return pl.pallas_call(
        _lstm_recurrence_kernel,
        out_shape=(
            jax.ShapeDtypeStruct((T, N, H), jnp.float32),
            jax.ShapeDtypeStruct((T, N, H), jnp.float32),
        ),
        grid_spec=pltpu.PrefetchScalarGridSpec(
            num_scalar_prefetch=0,
            grid=(T,),
            in_specs=[
                pl.BlockSpec((N, 1), lambda t: (0, 0)),                # lengths
                pl.BlockSpec((1, N, G), lambda t: (t, 0, 0)),          # fwd gates
                pl.BlockSpec((1, N, G), lambda t: (T - 1 - t, 0, 0)),  # bwd gates
                pl.BlockSpec((H, G), lambda t: (0, 0)),                # W_hh fwd (resident)
                pl.BlockSpec((H, G), lambda t: (0, 0)),                # W_hh bwd (resident)
            ],
            out_specs=[
                pl.BlockSpec((1, N, H), lambda t: (t, 0, 0)),
                pl.BlockSpec((1, N, H), lambda t: (T - 1 - t, 0, 0)),
            ],
            scratch_shapes=[pltpu.VMEM((N, H), jnp.float32) for _ in range(4)],
        ),
        compiler_params=pltpu.CompilerParams(
            dimension_semantics=("arbitrary",),   # sequential recurrence
            vmem_limit_bytes=32 * 1024 * 1024,
        ),
    )(lengths_2d, gates_f, gates_b, whh_f_t, whh_b_t)


# ---------------------------------------------------------------------------
# BatchRNN layer wrapper: fold BN + biases, pre-transpose weights, run kernels.
# ---------------------------------------------------------------------------
def batch_rnn_forward(x, lengths, p):
    T, N, D = x.shape
    H = p["whh_f"].shape[1]

    def fold(wih, b_ih, b_hh):
        # TODO(synk): BatchNorm1d is applied in eval mode (running stats);
        # training-mode batch statistics are not computed in-kernel.
        if "bn_gamma" in p:
            g = p["bn_gamma"] / jnp.sqrt(p["bn_var"] + BN_EPS)
            w_eff = wih * g[None, :]
            b_eff = b_ih + b_hh + wih @ (p["bn_beta"] - p["bn_mean"] * g)
        else:
            w_eff = wih
            b_eff = b_ih + b_hh
        return w_eff, b_eff

    wf, bf = fold(p["wih_f"], p["bih_f"], p["bhh_f"])
    wb, bb = fold(p["wih_b"], p["bih_b"], p["bhh_b"])

    # Pre-transpose once in the wrapper; concat both directions so a single
    # lane-dense matmul produces every gate pre-activation: [T*N, D] @ [D, 8H].
    w_cat = jnp.concatenate([wf.T, wb.T], axis=1)          # [D, 8H]
    b_cat = jnp.concatenate([bf, bb], axis=0)              # [8H]

    gates = input_projection(x.reshape(T * N, D), w_cat, b_cat)
    gates = gates.reshape(T, N, 8 * H)
    gates_f = gates[..., : 4 * H]
    gates_b = gates[..., 4 * H:]

    out_f, out_b = lstm_bidir(
        gates_f, gates_b,
        jnp.transpose(p["whh_f"]),                         # [H, 4H]
        jnp.transpose(p["whh_b"]),
        lengths.astype(jnp.int32).reshape(N, 1),
    )
    # BatchRNN sums the two directions: view(T, N, 2, H).sum(2).
    return out_f + out_b


def asr_encoder_forward(x, lengths, params):
    for p in params:
        x = batch_rnn_forward(x, lengths, p)
    return x, lengths


# ---------------------------------------------------------------------------
# Plain-JAX reference (independent of the kernels / weight folding).
# ---------------------------------------------------------------------------
def _ref_lstm_dir(gates, whh_t, lengths, reverse):
    T, N, G = gates.shape
    H = G // 4
    ts = jnp.arange(T)
    if reverse:
        ts = ts[::-1]

    def step(carry, t):
        h, c = carry
        g = gates[t] + jnp.dot(h, whh_t, precision=jax.lax.Precision.HIGHEST)
        i = jax.nn.sigmoid(g[:, :H])
        f = jax.nn.sigmoid(g[:, H:2 * H])
        gg = jnp.tanh(g[:, 2 * H:3 * H])
        o = jax.nn.sigmoid(g[:, 3 * H:])
        c_new = f * c + i * gg
        h_new = o * jnp.tanh(c_new)
        valid = (t < lengths)[:, None]
        h = jnp.where(valid, h_new, h)
        c = jnp.where(valid, c_new, c)
        out = jnp.where(valid, h_new, 0.0)
        return (h, c), out

    init = (jnp.zeros((N, H), jnp.float32), jnp.zeros((N, H), jnp.float32))
    _, outs = jax.lax.scan(step, init, ts)
    if reverse:
        outs = outs[::-1]
    return outs


def ref_batch_rnn(x, lengths, p):
    H = p["whh_f"].shape[1]
    if "bn_gamma" in p:
        g = p["bn_gamma"] / jnp.sqrt(p["bn_var"] + BN_EPS)
        x = x * g + (p["bn_beta"] - p["bn_mean"] * g)

    def gates_for(wih, b_ih, b_hh):
        return (jnp.einsum("tnd,gd->tng", x, wih,
                           precision=jax.lax.Precision.HIGHEST)
                + b_ih + b_hh)

    gf = gates_for(p["wih_f"], p["bih_f"], p["bhh_f"])
    gb = gates_for(p["wih_b"], p["bih_b"], p["bhh_b"])
    of = _ref_lstm_dir(gf, p["whh_f"].T, lengths, reverse=False)
    ob = _ref_lstm_dir(gb, p["whh_b"].T, lengths, reverse=True)
    return of + ob


def ref_asr_encoder(x, lengths, params):
    for p in params:
        x = ref_batch_rnn(x, lengths, p)
    return x, lengths


# ---------------------------------------------------------------------------
# Deterministic parameters (PyTorch-style LSTM init) and smoke test.
# ---------------------------------------------------------------------------
def make_layer_params(key, d_in, hidden, use_bn):
    keys = jax.random.split(key, 12)
    bound = 1.0 / math.sqrt(hidden)

    def u(k, shape):
        return jax.random.uniform(k, shape, jnp.float32, -bound, bound)

    p = {
        "wih_f": u(keys[0], (4 * hidden, d_in)),
        "whh_f": u(keys[1], (4 * hidden, hidden)),
        "bih_f": u(keys[2], (4 * hidden,)),
        "bhh_f": u(keys[3], (4 * hidden,)),
        "wih_b": u(keys[4], (4 * hidden, d_in)),
        "whh_b": u(keys[5], (4 * hidden, hidden)),
        "bih_b": u(keys[6], (4 * hidden,)),
        "bhh_b": u(keys[7], (4 * hidden,)),
    }
    if use_bn:
        p["bn_gamma"] = 1.0 + 0.1 * jax.random.normal(keys[8], (d_in,), jnp.float32)
        p["bn_beta"] = 0.1 * jax.random.normal(keys[9], (d_in,), jnp.float32)
        p["bn_mean"] = 0.1 * jax.random.normal(keys[10], (d_in,), jnp.float32)
        p["bn_var"] = 0.5 + jax.nn.softplus(
            jax.random.normal(keys[11], (d_in,), jnp.float32))
    return p


if __name__ == "__main__":
    key = jax.random.PRNGKey(0)

    # Small-but-faithful shapes: ASR_Encoder defaults (768-dim features,
    # hidden_size=256, hidden_layers=3) on a short padded batch.
    T, N = 12, 4
    D_IN, HIDDEN, LAYERS = 768, 256, 3

    kx, kp = jax.random.split(key)
    x = jax.random.normal(kx, (T, N, D_IN), jnp.float32)      # time-major [T, N, D]
    lengths = jnp.array([T, 9, 7, 5], jnp.int32)               # max length == T

    layer_keys = jax.random.split(kp, LAYERS)
    params = []
    for layer in range(LAYERS):
        d_in = D_IN if layer == 0 else HIDDEN
        params.append(make_layer_params(layer_keys[layer], d_in, HIDDEN,
                                        use_bn=(layer > 0)))

    y, out_lengths = asr_encoder_forward(x, lengths, params)
    y = jax.block_until_ready(y)

    y_ref, _ = ref_asr_encoder(x, lengths, params)
    y_ref = jax.block_until_ready(y_ref)

    assert y.shape == (T, N, HIDDEN)
    max_err = float(jnp.max(jnp.abs(y - y_ref)))
    assert jnp.allclose(y, y_ref, atol=2e-3, rtol=2e-3), (
        f"mismatch vs reference, max abs err {max_err}")
    assert jnp.array_equal(out_lengths, lengths)

    print("KERNEL_OK")
</pallas_src>

<mosaic_0001>
module attributes {stable_mosaic.version = 11 : i64} {
  func.func @_proj_kernel(%arg0: i32, %arg1: i32, %arg2: memref<48x768xf32, #tpu.memory_space<vmem>>, %arg3: memref<768x512xf32, #tpu.memory_space<vmem>>, %arg4: memref<1x512xf32, #tpu.memory_space<vmem>>, %arg5: memref<48x512xf32, #tpu.memory_space<vmem>>) attributes {dimension_semantics = [#tpu.dimension_semantics<parallel>, #tpu.dimension_semantics<parallel>], iteration_bounds = array<i64: 4, 1>, scalar_prefetch = 0 : i64, scratch_operands = 0 : i64, tpu.core_type = #tpu.core_type<tc>, window_params = [{transform_indices = @transform_0, window_bounds = array<i64: 48, 768>}, {transform_indices = @transform_1, window_bounds = array<i64: 768, 512>}, {transform_indices = @transform_2, window_bounds = array<i64: 1, 512>}, {transform_indices = @transform_3, window_bounds = array<i64: 48, 512>}]} {
    %c0 = arith.constant 0 : index
    %c0_0 = arith.constant 0 : index
    %0 = vector.load %arg2[%c0, %c0_0] : memref<48x768xf32, #tpu.memory_space<vmem>>, vector<48x768xf32>
    %c0_1 = arith.constant 0 : index
    %c0_2 = arith.constant 0 : index
    %1 = vector.load %arg3[%c0_1, %c0_2] : memref<768x512xf32, #tpu.memory_space<vmem>>, vector<768x512xf32>
    %cst = arith.constant dense<0.000000e+00> : vector<48x512xf32>
    %2 = tpu.matmul %0, %1, %cst {dimension_numbers = #tpu.dot_dimension_numbers<[1], [0], [0], [1], [0, 0, 1, 1], [], []>} : vector<48x768xf32>, vector<768x512xf32>, vector<48x512xf32> -> vector<48x512xf32>
    %c0_3 = arith.constant 0 : index
    %c0_4 = arith.constant 0 : index
    %3 = vector.load %arg4[%c0_3, %c0_4] : memref<1x512xf32, #tpu.memory_space<vmem>>, vector<1x512xf32>
    %4 = vector.broadcast %3 : vector<1x512xf32> to vector<48x512xf32>
    %5 = arith.addf %2, %4 : vector<48x512xf32>
    %c0_5 = arith.constant 0 : index
    %c0_6 = arith.constant 0 : index
    %6 = vector.load %arg5[%c0_5, %c0_6] : memref<48x512xf32, #tpu.memory_space<vmem>>, vector<48x512xf32>
    tpu.vector_store %arg5[%c0_5, %c0_6], %5 {strides = array<i32>} : memref<48x512xf32, #tpu.memory_space<vmem>>, vector<48x512xf32>,
    return
  }
  func.func @transform_0(%arg0: i32, %arg1: i32) -> (i32, i32) {
    %c0_i32 = arith.constant 0 : i32
    %c0_i32_0 = arith.constant 0 : i32
    return %arg1, %c0_i32 : i32, i32
  }
  func.func @transform_1(%arg0: i32, %arg1: i32) -> (i32, i32) {
    %c0_i32 = arith.constant 0 : i32
    %c0_i32_0 = arith.constant 0 : i32
    return %c0_i32, %arg0 : i32, i32
  }
  func.func @transform_2(%arg0: i32, %arg1: i32) -> (i32, i32) {
    %c0_i32 = arith.constant 0 : i32
    %c0_i32_0 = arith.constant 0 : i32
    return %c0_i32, %arg0 : i32, i32
  }
  func.func @transform_3(%arg0: i32, %arg1: i32) -> (i32, i32) {
    %c0_i32 = arith.constant 0 : i32
    return %arg1, %arg0 : i32, i32
  }
}

</mosaic_0001>

<llo_original>
// kernel: tpu_custom_call.1
$region0: #{tpu_custom_call.1}
  #allocation0 [shape = 'u32[]', space=smem, size = 0x4, offset = 0x4, fixed_abs, tag = 'smem constant byte address 0x4 - core index']
  #allocation1 [shape = 'u32[72,128]{1,0:T(1,128)}', space=vmem, size = 0x9000, scoped, tag = 'internal scratch']
  %s0 = inlined_call_operand.hbm [shape: f32[48,768], index: 0, kind: input, shape index: {}]
  %s1 = inlined_call_operand.hbm [shape: f32[768,2048], index: 1, kind: input, shape index: {}]
  %s2 = inlined_call_operand.hbm [shape: f32[1,2048], index: 2, kind: input, shape index: {}]
  %s3 = inlined_call_operand.hbm [shape: f32[48,2048], index: 3, kind: output, shape index: {}]
  %s4 = sld [smem:[#allocation0]]
  $region57: #{tpu_custom_call.1} parent=0
    _
  %s6 = ssub.s32 1, %s4
  %s7 = scalar_select 0, %s6, %s4
  $region1: #{tpu_custom_call.1} parent=0
    #allocation2 [shape = 'u8[147456]{0}', space=vmem, size = 0x24000, scoped, tag = 'input window, operand 0, single buffered']
    #allocation3 [shape = 's32[2]{0}', space=sflag, size = 0x8, scoped, tag = 'scoped memory for tpu_custom_call.1']
    #allocation4 [shape = 's32[2]{0}', space=sflag, size = 0x8, scoped, tag = 'scoped memory for tpu_custom_call.1']
    #allocation5 [shape = 'u8[3145728]{0}', space=vmem, size = 0x300000, scoped, tag = 'input window, operand 1']
    #allocation6 [shape = 's32[2]{0}', space=sflag, size = 0x8, scoped, tag = 'scoped memory for tpu_custom_call.1']
    #allocation7 [shape = 'u8[4096]{0}', space=vmem, size = 0x1000, scoped, tag = 'input window, operand 2']
    #allocation8 [shape = 'u8[196608]{0}', space=vmem, size = 0x30000, scoped, tag = 'output window, operand 0']
    %8 = vsyncpa [#allocation3], 0
    %9 = vsyncpa [#allocation6], 0
    %s10 = scalar_lea.sflag [#allocation6], 1
    %11 = vsyncpa %s10, 0
    %12 = vsyncpa [#allocation4], 0
    %s13 = scalar_lea.sflag [#allocation4], 1
    %14 = vsyncpa %s13, 0
    loop: start=0, step=1, limit=6
    $region2: #{tpu_custom_call.1} parent=1 // loop_pre_header
      _
    $region3: #{tpu_custom_call.1} parent=1 // loop_header
      %s16 = sphi 0, %s20
      %p17 = scmp.ge.s32.totalorder %s16, 6
      %s23 = sphi 0, %s35
      %s24 = sphi 0, %s31
      %s25 = sphi 0, %s23
      %s26 = sphi 0, %s24
      %s27 = sphi 0, %s25
      %s28 = sphi 0, %s26
      %s38 = sphi 0, %s40
      %s41 = sphi 0, %s38
      %s42 = sphi 0, %s41
      %s58 = sphi 0, %s42
      %s64 = sphi 0, %s66
      %s67 = sphi 0, %s64
      %s68 = sphi 0, %s67
      %s84 = sphi 0, %s68
      %s90 = sphi 0, %s92
      %s93 = sphi 0, %s90
      %s94 = sphi 0, %s93
      %s110 = sphi 0, %s94
      %s118 = sphi 0, %s120
      %s121 = sphi 0, %s118
      %s122 = sphi 0, %s121
      %s138 = sphi 0, %s122
    $region4: #{tpu_custom_call.1} parent=1 // loop_header_branch
      %19 = sbr.rel (%p17) target = $region8
    $region5: #{tpu_custom_call.1} parent=1 // loop_body
      %s21 = ssub.s32 %s16, 1
      %s22 = ssub.s32 %s16, 2
      %s29 = sadd.s32 1, %s24
      %p30 = scmp.ge.s32.totalorder %s29, 1
      %s31 = scalar_select %p30, 0, %s29
      %s32 = sadd.s32 1, %s23
      %s33 = scalar_select %p30, %s32, %s23
      %p34 = scmp.ge.s32.totalorder %s33, 4
      %s35 = scalar_select %p34, 0, %s33
      %s36 = ssub.s32 %s24, %s31
      %p37 = scmp.eq.s32.totalorder %s36, 0
      %s39 = sadd.s32 %s38, 1
      %s40 = scalar_select %p37, %s38, %s39
      %p43 = pneg %p37
      %p44 = scmp.eq.s32.totalorder %s16, 3
      %p45 = por %p43, %p44
      %p46 = scmp.ne.s32.totalorder %s38, %s41
      %p47 = scmp.eq.s32.totalorder %s16, 0
      %p48 = por %p46, %p47
      %p49 = scmp.ne.s32.totalorder %s38, %s41
      %p50 = scmp.eq.s32.totalorder %s21, 3
      %p51 = por %p49, %p50
      %p52 = scmp.ne.s32.totalorder %s41, %s42
      %p53 = scmp.eq.s32.totalorder %s21, 0
      %p54 = por %p52, %p53
      %p55 = scmp.ne.s32.totalorder %s41, %s42
      %p56 = scmp.eq.s32.totalorder %s22, 3
      %p57 = por %p55, %p56
      %p59 = scmp.ne.s32.totalorder %s42, %s58
      %p60 = scmp.eq.s32.totalorder %s22, 0
      %p61 = por %p59, %p60
      %s62 = ssub.s32 %s23, %s35
      %p63 = scmp.eq.s32.totalorder %s62, 0
      %s65 = sadd.s32 %s64, 1
      %s66 = scalar_select %p63, %s64, %s65
      %p69 = pneg %p63
      %p70 = scmp.eq.s32.totalorder %s16, 3
      %p71 = por %p69, %p70
      %p72 = scmp.ne.s32.totalorder %s64, %s67
      %p73 = scmp.eq.s32.totalorder %s16, 0
      %p74 = por %p72, %p73
      %p75 = scmp.ne.s32.totalorder %s64, %s67
      %p76 = scmp.eq.s32.totalorder %s21, 3
      %p77 = por %p75, %p76
      %p78 = scmp.ne.s32.totalorder %s67, %s68
      %p79 = scmp.eq.s32.totalorder %s21, 0
      %p80 = por %p78, %p79
      %p81 = scmp.ne.s32.totalorder %s67, %s68
      %p82 = scmp.eq.s32.totalorder %s22, 3
      %p83 = por %p81, %p82
      %p85 = scmp.ne.s32.totalorder %s68, %s84
      %p86 = scmp.eq.s32.totalorder %s22, 0
      %p87 = por %p85, %p86
      %s88 = ssub.s32 %s23, %s35
      %p89 = scmp.eq.s32.totalorder %s88, 0
      %s91 = sadd.s32 %s90, 1
      %s92 = scalar_select %p89, %s90, %s91
      %p95 = pneg %p89
      %p96 = scmp.eq.s32.totalorder %s16, 3
      %p97 = por %p95, %p96
      %p98 = scmp.ne.s32.totalorder %s90, %s93
      %p99 = scmp.eq.s32.totalorder %s16, 0
      %p100 = por %p98, %p99
      %p101 = scmp.ne.s32.totalorder %s90, %s93
      %p102 = scmp.eq.s32.totalorder %s21, 3
      %p103 = por %p101, %p102
      %p104 = scmp.ne.s32.totalorder %s93, %s94
      %p105 = scmp.eq.s32.totalorder %s21, 0
      %p106 = por %p104, %p105
      %p107 = scmp.ne.s32.totalorder %s93, %s94
      %p108 = scmp.eq.s32.totalorder %s22, 3
      %p109 = por %p107, %p108
      %p111 = scmp.ne.s32.totalorder %s94, %s110
      %p112 = scmp.eq.s32.totalorder %s22, 0
      %p113 = por %p111, %p112
      %s114 = ssub.s32 %s24, %s31
      %s115 = ssub.s32 %s23, %s35
      %s116 = sor.u32 %s114, %s115
      %p117 = scmp.eq.s32.totalorder %s116, 0
      %s119 = sadd.s32 %s118, 1
      %s120 = scalar_select %p117, %s118, %s119
      %p123 = pneg %p117
      %p124 = scmp.eq.s32.totalorder %s16, 3
      %p125 = por %p123, %p124
      %p126 = scmp.ne.s32.totalorder %s118, %s121
      %p127 = scmp.eq.s32.totalorder %s16, 0
      %p128 = por %p126, %p127
      %p129 = scmp.ne.s32.totalorder %s118, %s121
      %p130 = scmp.eq.s32.totalorder %s21, 3
      %p131 = por %p129, %p130
      %p132 = scmp.ne.s32.totalorder %s121, %s122
      %p133 = scmp.eq.s32.totalorder %s21, 0
      %p134 = por %p132, %p133
      %p135 = scmp.ne.s32.totalorder %s121, %s122
      %p136 = scmp.eq.s32.totalorder %s22, 3
      %p137 = por %p135, %p136
      %p139 = scmp.ne.s32.totalorder %s122, %s138
      %p140 = scmp.eq.s32.totalorder %s22, 0
      %p141 = por %p139, %p140
      %p142 = scmp.le.s32.totalorder 1, %s16
      %p143 = scmp.lt.s32.totalorder %s16, 5
      %p144 = pnand %p142, %p143
      %p145 = pneg %p144
      // Predicated region
      $region9: #{tpu_custom_call.1} parent=5 // pred_check
        _
      $region10: #{tpu_custom_call.1} parent=5 // pred_check_branch
        %147 = sbr.rel (%p144) target = $region12
      $region11: #{tpu_custom_call.1} parent=5 // pred_region
        %s148 = ssub.s32 %s16, 1
        // Predicated region
        $region13: #{tpu_custom_call.1} parent=11 // pred_check
          %p149 = pneg %p54
        $region14: #{tpu_custom_call.1} parent=11 // pred_check_branch
          %151 = sbr.rel (%p149) target = $region16
        $region15: #{tpu_custom_call.1} parent=11 // pred_region
          %s152 = smul.u32 6, %s26
          %154 = vsyncadd [#allocation3], 0
          %s155 = smul.addr %s152, 6
          %s156 = smul.addr %s155, 8
          %s157 = scalar_lea.hbm %s0, %s156
          %s158 = sshll.u32 %s157, 4
          %s159 = int_to_ptr.hbm [resolvable:$true] %s158
          %s160 = sshll.u32 [#allocation2], 4
          %s161 = int_to_ptr.vmem [resolvable:$true] %s160
          %166 = dma.hbm_to_vmem [thread:$0]  %s159, 4608, %s161, [#allocation3], 768, 768, 48
        $region16: #{tpu_custom_call.1} parent=11 // pred_fallthru
          _
      $region12: #{tpu_custom_call.1} parent=5 // pred_fallthru
        _
      %p167 = scmp.lt.s32.totalorder %s16, 4
      // Predicated region
      $region17: #{tpu_custom_call.1} parent=5 // pred_check
        %p168 = pneg %p167
      $region18: #{tpu_custom_call.1} parent=5 // pred_check_branch
        %170 = sbr.rel (%p168) target = $region20
      $region19: #{tpu_custom_call.1} parent=5 // pred_region
        // Predicated region
        $region21: #{tpu_custom_call.1} parent=19 // pred_check
          %p171 = pneg %p74
        $region22: #{tpu_custom_call.1} parent=19 // pred_check_branch
          %173 = sbr.rel (%p171) target = $region24
        $region23: #{tpu_custom_call.1} parent=19 // pred_region
          %s174 = sand.u32 %s16, 1
          %s175 = scalar_lea.sflag [#allocation6], %s174
          %s176 = sand.u32 %s64, 1
          %s177 = smul.addr %s176, 3072
          %s178 = scalar_lea.vmem [#allocation5], %s177
          %s179 = smul.u32 4, %s23
          %181 = vsyncadd %s175, 0
          %s182 = smul.addr %s179, 8
          %s183 = scalar_lea.hbm %s1, %s182
          %s184 = sshll.u32 %s183, 4
          %s185 = int_to_ptr.hbm [resolvable:$true] %s184
          %s186 = sshll.u32 %s178, 4
          %s187 = int_to_ptr.vmem [resolvable:$true] %s186
          %192 = dma.hbm_to_vmem [thread:$0]  %s185, 49152, %s187, %s175, 2048, 512, 32
        $region24: #{tpu_custom_call.1} parent=19 // pred_fallthru
          _
        // Predicated region
        $region25: #{tpu_custom_call.1} parent=19 // pred_check
          %p193 = pneg %p100
        $region26: #{tpu_custom_call.1} parent=19 // pred_check_branch
          %195 = sbr.rel (%p193) target = $region28
        $region27: #{tpu_custom_call.1} parent=19 // pred_region
          %s196 = sand.u32 %s16, 1
          %s197 = scalar_lea.sflag [#allocation6], %s196
          %s198 = sand.u32 %s90, 1
          %s199 = smul.addr %s198, 4
          %s200 = scalar_lea.vmem [#allocation7], %s199
          %s201 = smul.u32 4, %s23
          %203 = vsyncadd %s197, 0
          %s204 = scalar_lea.hbm %s2, %s201
          %s206 = sshll.u32 %s204, 4
          %s207 = int_to_ptr.hbm [resolvable:$true] %s206
          %s208 = sshll.u32 %s200, 4
          %s209 = int_to_ptr.vmem [resolvable:$true] %s208
          %211 = dma.hbm_to_vmem [thread:$0]  %s207, 64, %s209, %s197
        $region28: #{tpu_custom_call.1} parent=19 // pred_fallthru
          _
      $region20: #{tpu_custom_call.1} parent=5 // pred_fallthru
        _
      %p212 = scmp.le.s32.totalorder 1, %s16
      %p213 = scmp.lt.s32.totalorder %s16, 5
      %p214 = pnand %p212, %p213
      %p215 = pneg %p214
      // Predicated region
      $region29: #{tpu_custom_call.1} parent=5 // pred_check
        _
      $region30: #{tpu_custom_call.1} parent=5 // pred_check_branch
        %217 = sbr.rel (%p214) target = $region32
      $region31: #{tpu_custom_call.1} parent=5 // pred_region
        %s218 = ssub.s32 %s16, 1
        // Predicated region
        $region33: #{tpu_custom_call.1} parent=31 // pred_check
          %p219 = pneg %p54
        $region34: #{tpu_custom_call.1} parent=31 // pred_check_branch
          %221 = sbr.rel (%p219) target = $region36
        $region35: #{tpu_custom_call.1} parent=31 // pred_region
          %223 = dma.done [#allocation3], 4608
        $region36: #{tpu_custom_call.1} parent=31 // pred_fallthru
          _
        %s224 = sand.u32 %s21, 1
        %s225 = scalar_lea.sflag [#allocation6], %s224
        %s226 = sand.u32 %s67, 1
        %s227 = smul.addr %s226, 3072
        %s228 = scalar_lea.vmem [#allocation5], %s227
        // Predicated region
        $region37: #{tpu_custom_call.1} parent=31 // pred_check
          %p229 = pneg %p80
        $region38: #{tpu_custom_call.1} parent=31 // pred_check_branch
          %231 = sbr.rel (%p229) target = $region40
        $region39: #{tpu_custom_call.1} parent=31 // pred_region
          %233 = dma.done %s225, 49152
        $region40: #{tpu_custom_call.1} parent=31 // pred_fallthru
          _
        %s234 = sand.u32 %s21, 1
        %s235 = scalar_lea.sflag [#allocation6], %s234
        %s236 = sand.u32 %s93, 1
        %s237 = smul.addr %s236, 4
        %s238 = scalar_lea.vmem [#allocation7], %s237
        // Predicated region
        $region41: #{tpu_custom_call.1} parent=31 // pred_check
          %p239 = pneg %p106
        $region42: #{tpu_custom_call.1} parent=31 // pred_check_branch
          %241 = sbr.rel (%p239) target = $region44
        $region43: #{tpu_custom_call.1} parent=31 // pred_region
          %243 = dma.done %s235, 64
        $region44: #{tpu_custom_call.1} parent=31 // pred_fallthru
          _
        %p244 = pneg %p54
        %p245 = pneg %p51
        %s246 = sand.u32 %s21, 1
        %s247 = scalar_lea.sflag [#allocation6], %s246
        %s248 = sand.u32 %s67, 1
        %s249 = smul.addr %s248, 3072
        %s250 = scalar_lea.vmem [#allocation5], %s249
        %p251 = pneg %p80
        %p252 = pneg %p77
        %s253 = sand.u32 %s21, 1
        %s254 = scalar_lea.sflag [#allocation6], %s253
        %s255 = sand.u32 %s93, 1
        %s256 = smul.addr %s255, 4
        %s257 = scalar_lea.vmem [#allocation7], %s256
        %p258 = pneg %p106
        %p259 = pneg %p103
        %p260 = pneg %p134
        %p261 = pneg %p131
        %s262 = sand.u32 %s121, 1
        %s263 = scalar_lea.sflag [#allocation4], %s262
        %s264 = sand.u32 %s121, 1
        %s265 = smul.addr %s264, 192
        %s266 = scalar_lea.vmem [#allocation8], %s265
        %s267 = smul.u32 6, %s26
        %s268 = smul.u32 4, %s25
        %s269 = smul.u32 4, %s25
        %s270 = smul.u32 6, %s26
        %s271 = smul.u32 4, %s25
        %v272 = vld [vmem:[#allocation2] sm:$0xff]
        %v273 = vld [vmem:[#allocation2 + $0x8] sm:$0xff]
        %v274 = vld [vmem:[#allocation2 + $0x10] sm:$0xff]
        %v275 = vld [vmem:[#allocation2 + $0x18] sm:$0xff]
        %v276 = vld [vmem:[#allocation2 + $0x20] sm:$0xff]
        %v277 = vld [vmem:[#allocation2 + $0x28] sm:$0xff]
        %v278 = vld [vmem:[#allocation2 + $0x30] sm:$0xff]
        %v279 = vld [vmem:[#allocation2 + $0x38] sm:$0xff]
        %v280 = vld [vmem:[#allocation2 + $0x40] sm:$0xff]
        %v281 = vld [vmem:[#allocation2 + $0x48] sm:$0xff]
        %v282 = vld [vmem:[#allocation2 + $0x50] sm:$0xff]
        %v283 = vld [vmem:[#allocation2 + $0x58] sm:$0xff]
        %v284 = vld [vmem:[#allocation2 + $0x60] sm:$0xff]
        %v285 = vld [vmem:[#allocation2 + $0x68] sm:$0xff]
        %v286 = vld [vmem:[#allocation2 + $0x70] sm:$0xff]
        %v287 = vld [vmem:[#allocation2 + $0x78] sm:$0xff]
        %v288 = vld [vmem:[#allocation2 + $0x80] sm:$0xff]
        %v289 = vld [vmem:[#allocation2 + $0x88] sm:$0xff]
        %v290 = vld [vmem:[#allocation2 + $0x90] sm:$0xff]
        %v291 = vld [vmem:[#allocation2 + $0x98] sm:$0xff]
        %v292 = vld [vmem:[#allocation2 + $0xa0] sm:$0xff]
        %v293 = vld [vmem:[#allocation2 + $0xa8] sm:$0xff]
        %v294 = vld [vmem:[#allocation2 + $0xb0] sm:$0xff]
        %v295 = vld [vmem:[#allocation2 + $0xb8] sm:$0xff]
        %v296 = vld [vmem:[#allocation2 + $0xc0] sm:$0xff]
        %v297 = vld [vmem:[#allocation2 + $0xc8] sm:$0xff]
        %v298 = vld [vmem:[#allocation2 + $0xd0] sm:$0xff]
        %v299 = vld [vmem:[#allocation2 + $0xd8] sm:$0xff]
        %v300 = vld [vmem:[#allocation2 + $0xe0] sm:$0xff]
        %v301 = vld [vmem:[#allocation2 + $0xe8] sm:$0xff]
        %v302 = vld [vmem:[#allocation2 + $0xf0] sm:$0xff]
        %v303 = vld [vmem:[#allocation2 + $0xf8] sm:$0xff]
        %v304 = vld [vmem:[#allocation2 + $0x100] sm:$0xff]
        %v305 = vld [vmem:[#allocation2 + $0x108] sm:$0xff]
        %v306 = vld [vmem:[#allocation2 + $0x110] sm:$0xff]
        %v307 = vld [vmem:[#allocation2 + $0x118] sm:$0xff]
        %v308 = vld [vmem:[%s228] sm:$0xff]
        %v309 = vld [vmem:[%s228 + $0x8] sm:$0xff]
        %v310 = vld [vmem:[%s228 + $0x10] sm:$0xff]
        %v311 = vld [vmem:[%s228 + $0x18] sm:$0xff]
        %v312 = vld [vmem:[%s228 + $0x20] sm:$0xff]
        %v313 = vld [vmem:[%s228 + $0x28] sm:$0xff]
        %v314 = vld [vmem:[%s228 + $0x30] sm:$0xff]
        %v315 = vld [vmem:[%s228 + $0x38] sm:$0xff]
        %v316 = vld [vmem:[%s228 + $0x40] sm:$0xff]
        %v317 = vld [vmem:[%s228 + $0x48] sm:$0xff]
        %v318 = vld [vmem:[%s228 + $0x50] sm:$0xff]
        %v319 = vld [vmem:[%s228 + $0x58] sm:$0xff]
        %v320 = vld [vmem:[%s228 + $0x60] sm:$0xff]
        %v321 = vld [vmem:[%s228 + $0x68] sm:$0xff]
        %v322 = vld [vmem:[%s228 + $0x70] sm:$0xff]
        %v323 = vld [vmem:[%s228 + $0x78] sm:$0xff]
        %v324 = vld [vmem:[%s228 + $0x80] sm:$0xff]
        %v325 = vld [vmem:[%s228 + $0x88] sm:$0xff]
        %v326 = vld [vmem:[%s228 + $0x90] sm:$0xff]
        %v327 = vld [vmem:[%s228 + $0x98] sm:$0xff]
        %v328 = vld [vmem:[%s228 + $0xa0] sm:$0xff]
        %v329 = vld [vmem:[%s228 + $0xa8] sm:$0xff]
        %v330 = vld [vmem:[%s228 + $0xb0] sm:$0xff]
        %v331 = vld [vmem:[%s228 + $0xb8] sm:$0xff]
        %v332 = vld [vmem:[%s228 + $0xc0] sm:$0xff]
        %v333 = vld [vmem:[%s228 + $0xc8] sm:$0xff]
        %v334 = vld [vmem:[%s228 + $0xd0] sm:$0xff]
        %v335 = vld [vmem:[%s228 + $0xd8] sm:$0xff]
        %v336 = vld [vmem:[%s228 + $0xe0] sm:$0xff]
        %v337 = vld [vmem:[%s228 + $0xe8] sm:$0xff]
        %v338 = vld [vmem:[%s228 + $0xf0] sm:$0xff]
        %v339 = vld [vmem:[%s228 + $0xf8] sm:$0xff]
        %v340 = vld [vmem:[%s228 + $0x100] sm:$0xff]
        %v341 = vld [vmem:[%s228 + $0x108] sm:$0xff]
        %v342 = vld [vmem:[%s228 + $0x110] sm:$0xff]
        %v343 = vld [vmem:[%s228 + $0x118] sm:$0xff]
        %v344 = vld [vmem:[%s228 + $0x120] sm:$0xff]
        %v345 = vld [vmem:[%s228 + $0x128] sm:$0xff]
        %v346 = vld [vmem:[%s228 + $0x130] sm:$0xff]
        %v347 = vld [vmem:[%s228 + $0x138] sm:$0xff]
        %v348 = vld [vmem:[%s228 + $0x140] sm:$0xff]
        %v349 = vld [vmem:[%s228 + $0x148] sm:$0xff]
        %v350 = vld [vmem:[%s228 + $0x150] sm:$0xff]
        %v351 = vld [vmem:[%s228 + $0x158] sm:$0xff]
        %v352 = vld [vmem:[%s228 + $0x160] sm:$0xff]
        %v353 = vld [vmem:[%s228 + $0x168] sm:$0xff]
        %v354 = vld [vmem:[%s228 + $0x170] sm:$0xff]
        %v355 = vld [vmem:[%s228 + $0x178] sm:$0xff]
        %v356 = vld [vmem:[%s228 + $0x180] sm:$0xff]
        %v357 = vld [vmem:[%s228 + $0x188] sm:$0xff]
        %v358 = vld [vmem:[%s228 + $0x190] sm:$0xff]
        %v359 = vld [vmem:[%s228 + $0x198] sm:$0xff]
        %v360 = vld [vmem:[%s228 + $0x1a0] sm:$0xff]
        %v361 = vld [vmem:[%s228 + $0x1a8] sm:$0xff]
        %v362 = vld [vmem:[%s228 + $0x1b0] sm:$0xff]
        %v363 = vld [vmem:[%s228 + $0x1b8] sm:$0xff]
        %v364 = vld [vmem:[%s228 + $0x1c0] sm:$0xff]
        %v365 = vld [vmem:[%s228 + $0x1c8] sm:$0xff]
        %v366 = vld [vmem:[%s228 + $0x1d0] sm:$0xff]
        %v367 = vld [vmem:[%s228 + $0x1d8] sm:$0xff]
        %v368 = vld [vmem:[%s228 + $0x1e0] sm:$0xff]
        %v369 = vld [vmem:[%s228 + $0x1e8] sm:$0xff]
        %v370 = vld [vmem:[%s228 + $0x1f0] sm:$0xff]
        %v371 = vld [vmem:[%s228 + $0x1f8] sm:$0xff]
        %v372 = vld [vmem:[%s228 + $0x200] sm:$0xff]
        %v373 = vld [vmem:[%s228 + $0x208] sm:$0xff]
        %v374 = vld [vmem:[%s228 + $0x210] sm:$0xff]
        %v375 = vld [vmem:[%s228 + $0x218] sm:$0xff]
        %v376 = vld [vmem:[%s228 + $0x220] sm:$0xff]
        %v377 = vld [vmem:[%s228 + $0x228] sm:$0xff]
        %v378 = vld [vmem:[%s228 + $0x230] sm:$0xff]
        %v379 = vld [vmem:[%s228 + $0x238] sm:$0xff]
        %v380 = vld [vmem:[%s228 + $0x240] sm:$0xff]
        %v381 = vld [vmem:[%s228 + $0x248] sm:$0xff]
        %v382 = vld [vmem:[%s228 + $0x250] sm:$0xff]
        %v383 = vld [vmem:[%s228 + $0x258] sm:$0xff]
        %v384 = vld [vmem:[%s228 + $0x260] sm:$0xff]
        %v385 = vld [vmem:[%s228 + $0x268] sm:$0xff]
        %v386 = vld [vmem:[%s228 + $0x270] sm:$0xff]
        %v387 = vld [vmem:[%s228 + $0x278] sm:$0xff]
        %v388 = vld [vmem:[%s228 + $0x280] sm:$0xff]
        %v389 = vld [vmem:[%s228 + $0x288] sm:$0xff]
        %v390 = vld [vmem:[%s228 + $0x290] sm:$0xff]
        %v391 = vld [vmem:[%s228 + $0x298] sm:$0xff]
        %v392 = vld [vmem:[%s228 + $0x2a0] sm:$0xff]
        %v393 = vld [vmem:[%s228 + $0x2a8] sm:$0xff]
        %v394 = vld [vmem:[%s228 + $0x2b0] sm:$0xff]
        %v395 = vld [vmem:[%s228 + $0x2b8] sm:$0xff]
        %v396 = vld [vmem:[%s228 + $0x2c0] sm:$0xff]
        %v397 = vld [vmem:[%s228 + $0x2c8] sm:$0xff]
        %v398 = vld [vmem:[%s228 + $0x2d0] sm:$0xff]
        %v399 = vld [vmem:[%s228 + $0x2d8] sm:$0xff]
        %v400 = vld [vmem:[%s228 + $0x2e0] sm:$0xff]
        %v401 = vld [vmem:[%s228 + $0x2e8] sm:$0xff]
        %v402 = vld [vmem:[%s228 + $0x2f0] sm:$0xff]
        %v403 = vld [vmem:[%s228 + $0x2f8] sm:$0xff]
        %v404 = vld [vmem:[%s228 + $0x300] sm:$0xff]
        %v405 = vld [vmem:[%s228 + $0x308] sm:$0xff]
        %v406 = vld [vmem:[%s228 + $0x310] sm:$0xff]
        %v407 = vld [vmem:[%s228 + $0x318] sm:$0xff]
        %v408 = vld [vmem:[%s228 + $0x320] sm:$0xff]
        %v409 = vld [vmem:[%s228 + $0x328] sm:$0xff]
        %v410 = vld [vmem:[%s228 + $0x330] sm:$0xff]
        %v411 = vld [vmem:[%s228 + $0x338] sm:$0xff]
        %v412 = vld [vmem:[%s228 + $0x340] sm:$0xff]
        %v413 = vld [vmem:[%s228 + $0x348] sm:$0xff]
        %v414 = vld [vmem:[%s228 + $0x350] sm:$0xff]
        %v415 = vld [vmem:[%s228 + $0x358] sm:$0xff]
        %v416 = vld [vmem:[%s228 + $0x360] sm:$0xff]
        %v417 = vld [vmem:[%s228 + $0x368] sm:$0xff]
        %v418 = vld [vmem:[%s228 + $0x370] sm:$0xff]
        %v419 = vld [vmem:[%s228 + $0x378] sm:$0xff]
        %v420 = vld [vmem:[%s228 + $0x380] sm:$0xff]
        %v421 = vld [vmem:[%s228 + $0x388] sm:$0xff]
        %v422 = vld [vmem:[%s228 + $0x390] sm:$0xff]
        %v423 = vld [vmem:[%s228 + $0x398] sm:$0xff]
        %v424 = vld [vmem:[%s228 + $0x3a0] sm:$0xff]
        %v425 = vld [vmem:[%s228 + $0x3a8] sm:$0xff]
        %v426 = vld [vmem:[%s228 + $0x3b0] sm:$0xff]
        %v427 = vld [vmem:[%s228 + $0x3b8] sm:$0xff]
        %v428 = vld [vmem:[%s228 + $0x3c0] sm:$0xff]
        %v429 = vld [vmem:[%s228 + $0x3c8] sm:$0xff]
        %v430 = vld [vmem:[%s228 + $0x3d0] sm:$0xff]
        %v431 = vld [vmem:[%s228 + $0x3d8] sm:$0xff]
        %v432 = vld [vmem:[%s228 + $0x3e0] sm:$0xff]
        %v433 = vld [vmem:[%s228 + $0x3e8] sm:$0xff]
        %v434 = vld [vmem:[%s228 + $0x3f0] sm:$0xff]
        %v435 = vld [vmem:[%s228 + $0x3f8] sm:$0xff]
        %v436 = vld [vmem:[%s228 + $0x400] sm:$0xff]
        %v437 = vld [vmem:[%s228 + $0x408] sm:$0xff]
        %v438 = vld [vmem:[%s228 + $0x410] sm:$0xff]
        %v439 = vld [vmem:[%s228 + $0x418] sm:$0xff]
        %v440 = vld [vmem:[%s228 + $0x420] sm:$0xff]
        %v441 = vld [vmem:[%s228 + $0x428] sm:$0xff]
        %v442 = vld [vmem:[%s228 + $0x430] sm:$0xff]
        %v443 = vld [vmem:[%s228 + $0x438] sm:$0xff]
        %v444 = vld [vmem:[%s228 + $0x440] sm:$0xff]
        %v445 = vld [vmem:[%s228 + $0x448] sm:$0xff]
        %v446 = vld [vmem:[%s228 + $0x450] sm:$0xff]
        %v447 = vld [vmem:[%s228 + $0x458] sm:$0xff]
        %v448 = vld [vmem:[%s228 + $0x460] sm:$0xff]
        %v449 = vld [vmem:[%s228 + $0x468] sm:$0xff]
        %v450 = vld [vmem:[%s228 + $0x470] sm:$0xff]
        %v451 = vld [vmem:[%s228 + $0x478] sm:$0xff]
        %v452 = vld [vmem:[%s228 + $0x480] sm:$0xff]
        %v453 = vld [vmem:[%s228 + $0x488] sm:$0xff]
        %v454 = vld [vmem:[%s228 + $0x490] sm:$0xff]
        %v455 = vld [vmem:[%s228 + $0x498] sm:$0xff]
        %v456 = vld [vmem:[%s228 + $0x4a0] sm:$0xff]
        %v457 = vld [vmem:[%s228 + $0x4a8] sm:$0xff]
        %v458 = vld [vmem:[%s228 + $0x4b0] sm:$0xff]
        %v459 = vld [vmem:[%s228 + $0x4b8] sm:$0xff]
        %v460 = vld [vmem:[%s228 + $0x4c0] sm:$0xff]
        %v461 = vld [vmem:[%s228 + $0x4c8] sm:$0xff]
        %v462 = vld [vmem:[%s228 + $0x4d0] sm:$0xff]
        %v463 = vld [vmem:[%s228 + $0x4d8] sm:$0xff]
        %v464 = vld [vmem:[%s228 + $0x4e0] sm:$0xff]
        %v465 = vld [vmem:[%s228 + $0x4e8] sm:$0xff]
        %v466 = vld [vmem:[%s228 + $0x4f0] sm:$0xff]
        %v467 = vld [vmem:[%s228 + $0x4f8] sm:$0xff]
        %v468 = vld [vmem:[%s228 + $0x500] sm:$0xff]
        %v469 = vld [vmem:[%s228 + $0x508] sm:$0xff]
        %v470 = vld [vmem:[%s228 + $0x510] sm:$0xff]
        %v471 = vld [vmem:[%s228 + $0x518] sm:$0xff]
        %v472 = vld [vmem:[%s228 + $0x520] sm:$0xff]
        %v473 = vld [vmem:[%s228 + $0x528] sm:$0xff]
        %v474 = vld [vmem:[%s228 + $0x530] sm:$0xff]
        %v475 = vld [vmem:[%s228 + $0x538] sm:$0xff]
        %v476 = vld [vmem:[%s228 + $0x540] sm:$0xff]
        %v477 = vld [vmem:[%s228 + $0x548] sm:$0xff]
        %v478 = vld [vmem:[%s228 + $0x550] sm:$0xff]
        %v479 = vld [vmem:[%s228 + $0x558] sm:$0xff]
        %v480 = vld [vmem:[%s228 + $0x560] sm:$0xff]
        %v481 = vld [vmem:[%s228 + $0x568] sm:$0xff]
        %v482 = vld [vmem:[%s228 + $0x570] sm:$0xff]
        %v483 = vld [vmem:[%s228 + $0x578] sm:$0xff]
        %v484 = vld [vmem:[%s228 + $0x580] sm:$0xff]
        %v485 = vld [vmem:[%s228 + $0x588] sm:$0xff]
        %v486 = vld [vmem:[%s228 + $0x590] sm:$0xff]
        %v487 = vld [vmem:[%s228 + $0x598] sm:$0xff]
        %v488 = vld [vmem:[%s228 + $0x5a0] sm:$0xff]
        %v489 = vld [vmem:[%s228 + $0x5a8] sm:$0xff]
        %v490 = vld [vmem:[%s228 + $0x5b0] sm:$0xff]
        %v491 = vld [vmem:[%s228 + $0x5b8] sm:$0xff]
        %v492 = vld [vmem:[%s228 + $0x5c0] sm:$0xff]
        %v493 = vld [vmem:[%s228 + $0x5c8] sm:$0xff]
        %v494 = vld [vmem:[%s228 + $0x5d0] sm:$0xff]
        %v495 = vld [vmem:[%s228 + $0x5d8] sm:$0xff]
        %v496 = vld [vmem:[%s228 + $0x5e0] sm:$0xff]
        %v497 = vld [vmem:[%s228 + $0x5e8] sm:$0xff]
        %v498 = vld [vmem:[%s228 + $0x5f0] sm:$0xff]
        %v499 = vld [vmem:[%s228 + $0x5f8] sm:$0xff]
        %v500 = vld [vmem:[%s228 + $0x600] sm:$0xff]
        %v501 = vld [vmem:[%s228 + $0x608] sm:$0xff]
        %v502 = vld [vmem:[%s228 + $0x610] sm:$0xff]
        %v503 = vld [vmem:[%s228 + $0x618] sm:$0xff]
        %v504 = vld [vmem:[%s228 + $0x620] sm:$0xff]
        %v505 = vld [vmem:[%s228 + $0x628] sm:$0xff]
        %v506 = vld [vmem:[%s228 + $0x630] sm:$0xff]
        %v507 = vld [vmem:[%s228 + $0x638] sm:$0xff]
        %v508 = vld [vmem:[%s228 + $0x640] sm:$0xff]
        %v509 = vld [vmem:[%s228 + $0x648] sm:$0xff]
        %v510 = vld [vmem:[%s228 + $0x650] sm:$0xff]
        %v511 = vld [vmem:[%s228 + $0x658] sm:$0xff]
        %v512 = vld [vmem:[%s228 + $0x660] sm:$0xff]
        %v513 = vld [vmem:[%s228 + $0x668] sm:$0xff]
        %v514 = vld [vmem:[%s228 + $0x670] sm:$0xff]
        %v515 = vld [vmem:[%s228 + $0x678] sm:$0xff]
        %v516 = vld [vmem:[%s228 + $0x680] sm:$0xff]
        %v517 = vld [vmem:[%s228 + $0x688] sm:$0xff]
        %v518 = vld [vmem:[%s228 + $0x690] sm:$0xff]
        %v519 = vld [vmem:[%s228 + $0x698] sm:$0xff]
        %v520 = vld [vmem:[%s228 + $0x6a0] sm:$0xff]
        %v521 = vld [vmem:[%s228 + $0x6a8] sm:$0xff]
        %v522 = vld [vmem:[%s228 + $0x6b0] sm:$0xff]
        %v523 = vld [vmem:[%s228 + $0x6b8] sm:$0xff]
        %v524 = vld [vmem:[%s228 + $0x6c0] sm:$0xff]
        %v525 = vld [vmem:[%s228 + $0x6c8] sm:$0xff]
        %v526 = vld [vmem:[%s228 + $0x6d0] sm:$0xff]
        %v527 = vld [vmem:[%s228 + $0x6d8] sm:$0xff]
        %v528 = vld [vmem:[%s228 + $0x6e0] sm:$0xff]
        %v529 = vld [vmem:[%s228 + $0x6e8] sm:$0xff]
        %v530 = vld [vmem:[%s228 + $0x6f0] sm:$0xff]
        %v531 = vld [vmem:[%s228 + $0x6f8] sm:$0xff]
        %v532 = vld [vmem:[%s228 + $0x700] sm:$0xff]
        %v533 = vld [vmem:[%s228 + $0x708] sm:$0xff]
        %v534 = vld [vmem:[%s228 + $0x710] sm:$0xff]
        %v535 = vld [vmem:[%s228 + $0x718] sm:$0xff]
        %v536 = vld [vmem:[%s228 + $0x720] sm:$0xff]
        %v537 = vld [vmem:[%s228 + $0x728] sm:$0xff]
        %v538 = vld [vmem:[%s228 + $0x730] sm:$0xff]
        %v539 = vld [vmem:[%s228 + $0x738] sm:$0xff]
        %v540 = vld [vmem:[%s228 + $0x740] sm:$0xff]
        %v541 = vld [vmem:[%s228 + $0x748] sm:$0xff]
        %v542 = vld [vmem:[%s228 + $0x750] sm:$0xff]
        %v543 = vld [vmem:[%s228 + $0x758] sm:$0xff]
        %v544 = vld [vmem:[%s228 + $0x760] sm:$0xff]
        %v545 = vld [vmem:[%s228 + $0x768] sm:$0xff]
        %v546 = vld [vmem:[%s228 + $0x770] sm:$0xff]
        %v547 = vld [vmem:[%s228 + $0x778] sm:$0xff]
        %v548 = vld [vmem:[%s228 + $0x780] sm:$0xff]
        %v549 = vld [vmem:[%s228 + $0x788] sm:$0xff]
        %v550 = vld [vmem:[%s228 + $0x790] sm:$0xff]
        %v551 = vld [vmem:[%s228 + $0x798] sm:$0xff]
        %v552 = vld [vmem:[%s228 + $0x7a0] sm:$0xff]
        %v553 = vld [vmem:[%s228 + $0x7a8] sm:$0xff]
        %v554 = vld [vmem:[%s228 + $0x7b0] sm:$0xff]
        %v555 = vld [vmem:[%s228 + $0x7b8] sm:$0xff]
        %v556 = vld [vmem:[%s228 + $0x7c0] sm:$0xff]
        %v557 = vld [vmem:[%s228 + $0x7c8] sm:$0xff]
        %v558 = vld [vmem:[%s228 + $0x7d0] sm:$0xff]
        %v559 = vld [vmem:[%s228 + $0x7d8] sm:$0xff]
        %v560 = vld [vmem:[%s228 + $0x7e0] sm:$0xff]
        %v561 = vld [vmem:[%s228 + $0x7e8] sm:$0xff]
        %v562 = vld [vmem:[%s228 + $0x7f0] sm:$0xff]
        %v563 = vld [vmem:[%s228 + $0x7f8] sm:$0xff]
        %v564 = vld [vmem:[%s228 + $0x800] sm:$0xff]
        %v565 = vld [vmem:[%s228 + $0x808] sm:$0xff]
        %v566 = vld [vmem:[%s228 + $0x810] sm:$0xff]
        %v567 = vld [vmem:[%s228 + $0x818] sm:$0xff]
        %v568 = vld [vmem:[%s228 + $0x820] sm:$0xff]
        %v569 = vld [vmem:[%s228 + $0x828] sm:$0xff]
        %v570 = vld [vmem:[%s228 + $0x830] sm:$0xff]
        %v571 = vld [vmem:[%s228 + $0x838] sm:$0xff]
        %v572 = vld [vmem:[%s228 + $0x840] sm:$0xff]
        %v573 = vld [vmem:[%s228 + $0x848] sm:$0xff]
        %v574 = vld [vmem:[%s228 + $0x850] sm:$0xff]
        %v575 = vld [vmem:[%s228 + $0x858] sm:$0xff]
        %v576 = vld [vmem:[%s228 + $0x860] sm:$0xff]
        %v577 = vld [vmem:[%s228 + $0x868] sm:$0xff]
        %v578 = vld [vmem:[%s228 + $0x870] sm:$0xff]
        %v579 = vld [vmem:[%s228 + $0x878] sm:$0xff]
        %v580 = vld [vmem:[%s228 + $0x880] sm:$0xff]
        %v581 = vld [vmem:[%s228 + $0x888] sm:$0xff]
        %v582 = vld [vmem:[%s228 + $0x890] sm:$0xff]
        %v583 = vld [vmem:[%s228 + $0x898] sm:$0xff]
        %v584 = vld [vmem:[%s228 + $0x8a0] sm:$0xff]
        %v585 = vld [vmem:[%s228 + $0x8a8] sm:$0xff]
        %v586 = vld [vmem:[%s228 + $0x8b0] sm:$0xff]
        %v587 = vld [vmem:[%s228 + $0x8b8] sm:$0xff]
        %v588 = vld [vmem:[%s228 + $0x8c0] sm:$0xff]
        %v589 = vld [vmem:[%s228 + $0x8c8] sm:$0xff]
        %v590 = vld [vmem:[%s228 + $0x8d0] sm:$0xff]
        %v591 = vld [vmem:[%s228 + $0x8d8] sm:$0xff]
        %v592 = vld [vmem:[%s228 + $0x8e0] sm:$0xff]
        %v593 = vld [vmem:[%s228 + $0x8e8] sm:$0xff]
        %v594 = vld [vmem:[%s228 + $0x8f0] sm:$0xff]
        %v595 = vld [vmem:[%s228 + $0x8f8] sm:$0xff]
        %v596 = vld [vmem:[%s228 + $0x900] sm:$0xff]
        %v597 = vld [vmem:[%s228 + $0x908] sm:$0xff]
        %v598 = vld [vmem:[%s228 + $0x910] sm:$0xff]
        %v599 = vld [vmem:[%s228 + $0x918] sm:$0xff]
        %v600 = vld [vmem:[%s228 + $0x920] sm:$0xff]
        %v601 = vld [vmem:[%s228 + $0x928] sm:$0xff]
        %v602 = vld [vmem:[%s228 + $0x930] sm:$0xff]
        %v603 = vld [vmem:[%s228 + $0x938] sm:$0xff]
        %v604 = vld [vmem:[%s228 + $0x940] sm:$0xff]
        %v605 = vld [vmem:[%s228 + $0x948] sm:$0xff]
        %v606 = vld [vmem:[%s228 + $0x950] sm:$0xff]
        %v607 = vld [vmem:[%s228 + $0x958] sm:$0xff]
        %v608 = vld [vmem:[%s228 + $0x960] sm:$0xff]
        %v609 = vld [vmem:[%s228 + $0x968] sm:$0xff]
        %v610 = vld [vmem:[%s228 + $0x970] sm:$0xff]
        %v611 = vld [vmem:[%s228 + $0x978] sm:$0xff]
        %v612 = vld [vmem:[%s228 + $0x980] sm:$0xff]
        %v613 = vld [vmem:[%s228 + $0x988] sm:$0xff]
        %v614 = vld [vmem:[%s228 + $0x990] sm:$0xff]
        %v615 = vld [vmem:[%s228 + $0x998] sm:$0xff]
        %v616 = vld [vmem:[%s228 + $0x9a0] sm:$0xff]
        %v617 = vld [vmem:[%s228 + $0x9a8] sm:$0xff]
        %v618 = vld [vmem:[%s228 + $0x9b0] sm:$0xff]
        %v619 = vld [vmem:[%s228 + $0x9b8] sm:$0xff]
        %v620 = vld [vmem:[%s228 + $0x9c0] sm:$0xff]
        %v621 = vld [vmem:[%s228 + $0x9c8] sm:$0xff]
        %v622 = vld [vmem:[%s228 + $0x9d0] sm:$0xff]
        %v623 = vld [vmem:[%s228 + $0x9d8] sm:$0xff]
        %v624 = vld [vmem:[%s228 + $0x9e0] sm:$0xff]
        %v625 = vld [vmem:[%s228 + $0x9e8] sm:$0xff]
        %v626 = vld [vmem:[%s228 + $0x9f0] sm:$0xff]
        %v627 = vld [vmem:[%s228 + $0x9f8] sm:$0xff]
        %v628 = vld [vmem:[%s228 + $0xa00] sm:$0xff]
        %v629 = vld [vmem:[%s228 + $0xa08] sm:$0xff]
        %v630 = vld [vmem:[%s228 + $0xa10] sm:$0xff]
        %v631 = vld [vmem:[%s228 + $0xa18] sm:$0xff]
        %v632 = vld [vmem:[%s228 + $0xa20] sm:$0xff]
        %v633 = vld [vmem:[%s228 + $0xa28] sm:$0xff]
        %v634 = vld [vmem:[%s228 + $0xa30] sm:$0xff]
        %v635 = vld [vmem:[%s228 + $0xa38] sm:$0xff]
        %v636 = vld [vmem:[%s228 + $0xa40] sm:$0xff]
        %v637 = vld [vmem:[%s228 + $0xa48] sm:$0xff]
        %v638 = vld [vmem:[%s228 + $0xa50] sm:$0xff]
        %v639 = vld [vmem:[%s228 + $0xa58] sm:$0xff]
        %v640 = vld [vmem:[%s228 + $0xa60] sm:$0xff]
        %v641 = vld [vmem:[%s228 + $0xa68] sm:$0xff]
        %v642 = vld [vmem:[%s228 + $0xa70] sm:$0xff]
        %v643 = vld [vmem:[%s228 + $0xa78] sm:$0xff]
        %v644 = vld [vmem:[%s228 + $0xa80] sm:$0xff]
        %v645 = vld [vmem:[%s228 + $0xa88] sm:$0xff]
        %v646 = vld [vmem:[%s228 + $0xa90] sm:$0xff]
        %v647 = vld [vmem:[%s228 + $0xa98] sm:$0xff]
        %v648 = vld [vmem:[%s228 + $0xaa0] sm:$0xff]
        %v649 = vld [vmem:[%s228 + $0xaa8] sm:$0xff]
        %v650 = vld [vmem:[%s228 + $0xab0] sm:$0xff]
        %v651 = vld [vmem:[%s228 + $0xab8] sm:$0xff]
        %v652 = vld [vmem:[%s228 + $0xac0] sm:$0xff]
        %v653 = vld [vmem:[%s228 + $0xac8] sm:$0xff]
        %v654 = vld [vmem:[%s228 + $0xad0] sm:$0xff]
        %v655 = vld [vmem:[%s228 + $0xad8] sm:$0xff]
        %v656 = vld [vmem:[%s228 + $0xae0] sm:$0xff]
        %v657 = vld [vmem:[%s228 + $0xae8] sm:$0xff]
        %v658 = vld [vmem:[%s228 + $0xaf0] sm:$0xff]
        %v659 = vld [vmem:[%s228 + $0xaf8] sm:$0xff]
        %v660 = vld [vmem:[%s228 + $0xb00] sm:$0xff]
        %v661 = vld [vmem:[%s228 + $0xb08] sm:$0xff]
        %v662 = vld [vmem:[%s228 + $0xb10] sm:$0xff]
        %v663 = vld [vmem:[%s228 + $0xb18] sm:$0xff]
        %v664 = vld [vmem:[%s228 + $0xb20] sm:$0xff]
        %v665 = vld [vmem:[%s228 + $0xb28] sm:$0xff]
        %v666 = vld [vmem:[%s228 + $0xb30] sm:$0xff]
        %v667 = vld [vmem:[%s228 + $0xb38] sm:$0xff]
        %v668 = vld [vmem:[%s228 + $0xb40] sm:$0xff]
        %v669 = vld [vmem:[%s228 + $0xb48] sm:$0xff]
        %v670 = vld [vmem:[%s228 + $0xb50] sm:$0xff]
        %v671 = vld [vmem:[%s228 + $0xb58] sm:$0xff]
        %v672 = vld [vmem:[%s228 + $0xb60] sm:$0xff]
        %v673 = vld [vmem:[%s228 + $0xb68] sm:$0xff]
        %v674 = vld [vmem:[%s228 + $0xb70] sm:$0xff]
        %v675 = vld [vmem:[%s228 + $0xb78] sm:$0xff]
        %v676 = vld [vmem:[%s228 + $0xb80] sm:$0xff]
        %v677 = vld [vmem:[%s228 + $0xb88] sm:$0xff]
        %v678 = vld [vmem:[%s228 + $0xb90] sm:$0xff]
        %v679 = vld [vmem:[%s228 + $0xb98] sm:$0xff]
        %v680 = vld [vmem:[%s228 + $0xba0] sm:$0xff]
        %v681 = vld [vmem:[%s228 + $0xba8] sm:$0xff]
        %v682 = vld [vmem:[%s228 + $0xbb0] sm:$0xff]
        %v683 = vld [vmem:[%s228 + $0xbb8] sm:$0xff]
        %v684 = vld [vmem:[%s228 + $0xbc0] sm:$0xff]
        %v685 = vld [vmem:[%s228 + $0xbc8] sm:$0xff]
        %v686 = vld [vmem:[%s228 + $0xbd0] sm:$0xff]
        %v687 = vld [vmem:[%s228 + $0xbd8] sm:$0xff]
        %v688 = vld [vmem:[%s228 + $0xbe0] sm:$0xff]
        %v689 = vld [vmem:[%s228 + $0xbe8] sm:$0xff]
        %v690 = vld [vmem:[%s228 + $0xbf0] sm:$0xff]
        %v691 = vld [vmem:[%s228 + $0xbf8] sm:$0xff]
        %v692 = vld [vmem:[%s238] sm:$0xf]
        %v694 = vperm.slane %v692, 0
        %v695 = vperm.slane %v692, 1
        %v696 = vperm.slane %v692, 2
        %v697 = vperm.slane %v692, 3
        %702 = vmatpush.msra.mxu0 %v368
        %703 = vmatpush.msra.mxu0 %v364
        %704 = vmatpush.msra.mxu0 %v360
        %705 = vmatpush.msra.mxu0 %v356
        %706 = vmatpush.msra.mxu0 %v352
        %707 = vmatpush.msra.mxu0 %v348
        %708 = vmatpush.msra.mxu0 %v344
        %709 = vmatpush.msra.mxu0 %v340
        %710 = vmatpush.msra.mxu0 %v336
        %711 = vmatpush.msra.mxu0 %v332
        %712 = vmatpush.msra.mxu0 %v328
        %713 = vmatpush.msra.mxu0 %v324
        %714 = vmatpush.msra.mxu0 %v320
        %715 = vmatpush.msra.mxu0 %v316
        %716 = vmatpush.msra.mxu0 %v312
        %717 = vmatpush.msra.mxu0 %v308
        %718 = vmatmul.f32.gmra.mxu0 %v272
        %v719 = vpop.f32.mrf.mxu0
        %v720 = vadd.f32 %v694, %v719
        %721 = vmatmul.f32.gmra.mxu0 %v278
        %v722 = vpop.f32.mrf.mxu0
        %v723 = vadd.f32 %v694, %v722
        %724 = vmatmul.f32.gmra.mxu0 %v284
        %v725 = vpop.f32.mrf.mxu0
        %v726 = vadd.f32 %v694, %v725
        %727 = vmatmul.f32.gmra.mxu0 %v290
        %v728 = vpop.f32.mrf.mxu0
        %v729 = vadd.f32 %v694, %v728
        %730 = vmatmul.f32.gmra.mxu0 %v296
        %v731 = vpop.f32.mrf.mxu0
        %v732 = vadd.f32 %v694, %v731
        %733 = vmatmul.f32.gmra.mxu0 %v302
        %v734 = vpop.f32.mrf.mxu0
        %v735 = vadd.f32 %v694, %v734
        %736 = vdwg.mxu0
        %737 = vmatpush.msra.mxu0 %v432
        %738 = vmatpush.msra.mxu0 %v428
        %739 = vmatpush.msra.mxu0 %v424
        %740 = vmatpush.msra.mxu0 %v420
        %741 = vmatpush.msra.mxu0 %v416
        %742 = vmatpush.msra.mxu0 %v412
        %743 = vmatpush.msra.mxu0 %v408
        %744 = vmatpush.msra.mxu0 %v404
        %745 = vmatpush.msra.mxu0 %v400
        %746 = vmatpush.msra.mxu0 %v396
        %747 = vmatpush.msra.mxu0 %v392
        %748 = vmatpush.msra.mxu0 %v388
        %749 = vmatpush.msra.mxu0 %v384
        %750 = vmatpush.msra.mxu0 %v380
        %751 = vmatpush.msra.mxu0 %v376
        %752 = vmatpush.msra.mxu0 %v372
        %753 = vmatmul.f32.gmra.mxu0 %v273
        %v754 = vpop.f32.mrf.mxu0
        %v755 = vadd.f32 %v720, %v754
        %756 = vmatmul.f32.gmra.mxu0 %v279
        %v757 = vpop.f32.mrf.mxu0
        %v758 = vadd.f32 %v723, %v757
        %759 = vmatmul.f32.gmra.mxu0 %v285
        %v760 = vpop.f32.mrf.mxu0
        %v761 = vadd.f32 %v726, %v760
        %762 = vmatmul.f32.gmra.mxu0 %v291
        %v763 = vpop.f32.mrf.mxu0
        %v764 = vadd.f32 %v729, %v763
        %765 = vmatmul.f32.gmra.mxu0 %v297
        %v766 = vpop.f32.mrf.mxu0
        %v767 = vadd.f32 %v732, %v766
        %768 = vmatmul.f32.gmra.mxu0 %v303
        %v769 = vpop.f32.mrf.mxu0
        %v770 = vadd.f32 %v735, %v769
        %771 = vdwg.mxu0
        %772 = vmatpush.msra.mxu0 %v496
        %773 = vmatpush.msra.mxu0 %v492
        %774 = vmatpush.msra.mxu0 %v488
        %775 = vmatpush.msra.mxu0 %v484
        %776 = vmatpush.msra.mxu0 %v480
        %777 = vmatpush.msra.mxu0 %v476
        %778 = vmatpush.msra.mxu0 %v472
        %779 = vmatpush.msra.mxu0 %v468
        %780 = vmatpush.msra.mxu0 %v464
        %781 = vmatpush.msra.mxu0 %v460
        %782 = vmatpush.msra.mxu0 %v456
        %783 = vmatpush.msra.mxu0 %v452
        %784 = vmatpush.msra.mxu0 %v448
        %785 = vmatpush.msra.mxu0 %v444
        %786 = vmatpush.msra.mxu0 %v440
        %787 = vmatpush.msra.mxu0 %v436
        %788 = vmatmul.f32.gmra.mxu0 %v274
        %v789 = vpop.f32.mrf.mxu0
        %v790 = vadd.f32 %v755, %v789
        %791 = vmatmul.f32.gmra.mxu0 %v280
        %v792 = vpop.f32.mrf.mxu0
        %v793 = vadd.f32 %v758, %v792
        %794 = vmatmul.f32.gmra.mxu0 %v286
        %v795 = vpop.f32.mrf.mxu0
        %v796 = vadd.f32 %v761, %v795
        %797 = vmatmul.f32.gmra.mxu0 %v292
        %v798 = vpop.f32.mrf.mxu0
        %v799 = vadd.f32 %v764, %v798
        %800 = vmatmul.f32.gmra.mxu0 %v298
        %v801 = vpop.f32.mrf.mxu0
        %v802 = vadd.f32 %v767, %v801
        %803 = vmatmul.f32.gmra.mxu0 %v304
        %v804 = vpop.f32.mrf.mxu0
        %v805 = vadd.f32 %v770, %v804
        %806 = vdwg.mxu0
        %807 = vmatpush.msra.mxu0 %v560
        %808 = vmatpush.msra.mxu0 %v556
        %809 = vmatpush.msra.mxu0 %v552
        %810 = vmatpush.msra.mxu0 %v548
        %811 = vmatpush.msra.mxu0 %v544
        %812 = vmatpush.msra.mxu0 %v540
        %813 = vmatpush.msra.mxu0 %v536
        %814 = vmatpush.msra.mxu0 %v532
        %815 = vmatpush.msra.mxu0 %v528
        %816 = vmatpush.msra.mxu0 %v524
        %817 = vmatpush.msra.mxu0 %v520
        %818 = vmatpush.msra.mxu0 %v516
        %819 = vmatpush.msra.mxu0 %v512
        %820 = vmatpush.msra.mxu0 %v508
        %821 = vmatpush.msra.mxu0 %v504
        %822 = vmatpush.msra.mxu0 %v500
        %823 = vmatmul.f32.gmra.mxu0 %v275
        %v824 = vpop.f32.mrf.mxu0
        %v825 = vadd.f32 %v790, %v824
        %826 = vmatmul.f32.gmra.mxu0 %v281
        %v827 = vpop.f32.mrf.mxu0
        %v828 = vadd.f32 %v793, %v827
        %829 = vmatmul.f32.gmra.mxu0 %v287
        %v830 = vpop.f32.mrf.mxu0
        %v831 = vadd.f32 %v796, %v830
        %832 = vmatmul.f32.gmra.mxu0 %v293
        %v833 = vpop.f32.mrf.mxu0
        %v834 = vadd.f32 %v799, %v833
        %835 = vmatmul.f32.gmra.mxu0 %v299
        %v836 = vpop.f32.mrf.mxu0
        %v837 = vadd.f32 %v802, %v836
        %838 = vmatmul.f32.gmra.mxu0 %v305
        %v839 = vpop.f32.mrf.mxu0
        %v840 = vadd.f32 %v805, %v839
        %841 = vdwg.mxu0
        %842 = vmatpush.msra.mxu0 %v624
        %843 = vmatpush.msra.mxu0 %v620
        %844 = vmatpush.msra.mxu0 %v616
        %845 = vmatpush.msra.mxu0 %v612
        %846 = vmatpush.msra.mxu0 %v608
        %847 = vmatpush.msra.mxu0 %v604
        %848 = vmatpush.msra.mxu0 %v600
        %849 = vmatpush.msra.mxu0 %v596
        %850 = vmatpush.msra.mxu0 %v592
        %851 = vmatpush.msra.mxu0 %v588
        %852 = vmatpush.msra.mxu0 %v584
        %853 = vmatpush.msra.mxu0 %v580
        %854 = vmatpush.msra.mxu0 %v576
        %855 = vmatpush.msra.mxu0 %v572
        %856 = vmatpush.msra.mxu0 %v568
        %857 = vmatpush.msra.mxu0 %v564
        %858 = vmatmul.f32.gmra.mxu0 %v276
        %v859 = vpop.f32.mrf.mxu0
        %v860 = vadd.f32 %v825, %v859
        %861 = vmatmul.f32.gmra.mxu0 %v282
        %v862 = vpop.f32.mrf.mxu0
        %v863 = vadd.f32 %v828, %v862
        %864 = vmatmul.f32.gmra.mxu0 %v288
        %v865 = vpop.f32.mrf.mxu0
        %v866 = vadd.f32 %v831, %v865
        %867 = vmatmul.f32.gmra.mxu0 %v294
        %v868 = vpop.f32.mrf.mxu0
        %v869 = vadd.f32 %v834, %v868
        %870 = vmatmul.f32.gmra.mxu0 %v300
        %v871 = vpop.f32.mrf.mxu0
        %v872 = vadd.f32 %v837, %v871
        %873 = vmatmul.f32.gmra.mxu0 %v306
        %v874 = vpop.f32.mrf.mxu0
        %v875 = vadd.f32 %v840, %v874
        %876 = vdwg.mxu0
        %877 = vmatpush.msra.mxu0 %v688
        %878 = vmatpush.msra.mxu0 %v684
        %879 = vmatpush.msra.mxu0 %v680
        %880 = vmatpush.msra.mxu0 %v676
        %881 = vmatpush.msra.mxu0 %v672
        %882 = vmatpush.msra.mxu0 %v668
        %883 = vmatpush.msra.mxu0 %v664
        %884 = vmatpush.msra.mxu0 %v660
        %885 = vmatpush.msra.mxu0 %v656
        %886 = vmatpush.msra.mxu0 %v652
        %887 = vmatpush.msra.mxu0 %v648
        %888 = vmatpush.msra.mxu0 %v644
        %889 = vmatpush.msra.mxu0 %v640
        %890 = vmatpush.msra.mxu0 %v636
        %891 = vmatpush.msra.mxu0 %v632
        %892 = vmatpush.msra.mxu0 %v628
        %893 = vmatmul.f32.gmra.mxu0 %v277
        %v894 = vpop.f32.mrf.mxu0
        %v895 = vadd.f32 %v860, %v894
        %896 = vmatmul.f32.gmra.mxu0 %v283
        %v897 = vpop.f32.mrf.mxu0
        %v898 = vadd.f32 %v863, %v897
        %899 = vmatmul.f32.gmra.mxu0 %v289
        %v900 = vpop.f32.mrf.mxu0
        %v901 = vadd.f32 %v866, %v900
        %902 = vmatmul.f32.gmra.mxu0 %v295
        %v903 = vpop.f32.mrf.mxu0
        %v904 = vadd.f32 %v869, %v903
        %905 = vmatmul.f32.gmra.mxu0 %v301
        %v906 = vpop.f32.mrf.mxu0
        %v907 = vadd.f32 %v872, %v906
        %908 = vmatmul.f32.gmra.mxu0 %v307
        %v909 = vpop.f32.mrf.mxu0
        %v910 = vadd.f32 %v875, %v909
        %911 = vdwg.mxu0
        %912 = vmatpush.msra.mxu0 %v369
        %913 = vmatpush.msra.mxu0 %v365
        %914 = vmatpush.msra.mxu0 %v361
        %915 = vmatpush.msra.mxu0 %v357
        %916 = vmatpush.msra.mxu0 %v353
        %917 = vmatpush.msra.mxu0 %v349
        %918 = vmatpush.msra.mxu0 %v345
        %919 = vmatpush.msra.mxu0 %v341
        %920 = vmatpush.msra.mxu0 %v337
        %921 = vmatpush.msra.mxu0 %v333
        %922 = vmatpush.msra.mxu0 %v329
        %923 = vmatpush.msra.mxu0 %v325
        %924 = vmatpush.msra.mxu0 %v321
        %925 = vmatpush.msra.mxu0 %v317
        %926 = vmatpush.msra.mxu0 %v313
        %927 = vmatpush.msra.mxu0 %v309
        %928 = vmatmul.f32.gmra.mxu0 %v272
        %v929 = vpop.f32.mrf.mxu0
        %v930 = vadd.f32 %v695, %v929
        %931 = vmatmul.f32.gmra.mxu0 %v278
        %v932 = vpop.f32.mrf.mxu0
        %v933 = vadd.f32 %v695, %v932
        %934 = vmatmul.f32.gmra.mxu0 %v284
        %v935 = vpop.f32.mrf.mxu0
        %v936 = vadd.f32 %v695, %v935
        %937 = vmatmul.f32.gmra.mxu0 %v290
        %v938 = vpop.f32.mrf.mxu0
        %v939 = vadd.f32 %v695, %v938
        %940 = vmatmul.f32.gmra.mxu0 %v296
        %v941 = vpop.f32.mrf.mxu0
        %v942 = vadd.f32 %v695, %v941
        %943 = vmatmul.f32.gmra.mxu0 %v302
        %v944 = vpop.f32.mrf.mxu0
        %v945 = vadd.f32 %v695, %v944
        %946 = vdwg.mxu0
        %947 = vmatpush.msra.mxu0 %v433
        %948 = vmatpush.msra.mxu0 %v429
        %949 = vmatpush.msra.mxu0 %v425
        %950 = vmatpush.msra.mxu0 %v421
        %951 = vmatpush.msra.mxu0 %v417
        %952 = vmatpush.msra.mxu0 %v413
        %953 = vmatpush.msra.mxu0 %v409
        %954 = vmatpush.msra.mxu0 %v405
        %955 = vmatpush.msra.mxu0 %v401
        %956 = vmatpush.msra.mxu0 %v397
        %957 = vmatpush.msra.mxu0 %v393
        %958 = vmatpush.msra.mxu0 %v389
        %959 = vmatpush.msra.mxu0 %v385
        %960 = vmatpush.msra.mxu0 %v381
        %961 = vmatpush.msra.mxu0 %v377
        %962 = vmatpush.msra.mxu0 %v373
        %963 = vmatmul.f32.gmra.mxu0 %v273
        %v964 = vpop.f32.mrf.mxu0
        %v965 = vadd.f32 %v930, %v964
        %966 = vmatmul.f32.gmra.mxu0 %v279
        %v967 = vpop.f32.mrf.mxu0
        %v968 = vadd.f32 %v933, %v967
        %969 = vmatmul.f32.gmra.mxu0 %v285
        %v970 = vpop.f32.mrf.mxu0
        %v971 = vadd.f32 %v936, %v970
        %972 = vmatmul.f32.gmra.mxu0 %v291
        %v973 = vpop.f32.mrf.mxu0
        %v974 = vadd.f32 %v939, %v973
        %975 = vmatmul.f32.gmra.mxu0 %v297
        %v976 = vpop.f32.mrf.mxu0
        %v977 = vadd.f32 %v942, %v976
        %978 = vmatmul.f32.gmra.mxu0 %v303
        %v979 = vpop.f32.mrf.mxu0
        %v980 = vadd.f32 %v945, %v979
        %981 = vdwg.mxu0
        %982 = vmatpush.msra.mxu0 %v497
        %983 = vmatpush.msra.mxu0 %v493
        %984 = vmatpush.msra.mxu0 %v489
        %985 = vmatpush.msra.mxu0 %v485
        %986 = vmatpush.msra.mxu0 %v481
        %987 = vmatpush.msra.mxu0 %v477
        %988 = vmatpush.msra.mxu0 %v473
        %989 = vmatpush.msra.mxu0 %v469
        %990 = vmatpush.msra.mxu0 %v465
        %991 = vmatpush.msra.mxu0 %v461
        %992 = vmatpush.msra.mxu0 %v457
        %993 = vmatpush.msra.mxu0 %v453
        %994 = vmatpush.msra.mxu0 %v449
        %995 = vmatpush.msra.mxu0 %v445
        %996 = vmatpush.msra.mxu0 %v441
        %997 = vmatpush.msra.mxu0 %v437
        %998 = vmatmul.f32.gmra.mxu0 %v274
        %v999 = vpop.f32.mrf.mxu0
        %v1000 = vadd.f32 %v965, %v999
        %1001 = vmatmul.f32.gmra.mxu0 %v280
        %v1002 = vpop.f32.mrf.mxu0
        %v1003 = vadd.f32 %v968, %v1002
        %1004 = vmatmul.f32.gmra.mxu0 %v286
        %v1005 = vpop.f32.mrf.mxu0
        %v1006 = vadd.f32 %v971, %v1005
        %1007 = vmatmul.f32.gmra.mxu0 %v292
        %v1008 = vpop.f32.mrf.mxu0
        %v1009 = vadd.f32 %v974, %v1008
        %1010 = vmatmul.f32.gmra.mxu0 %v298
        %v1011 = vpop.f32.mrf.mxu0
        %v1012 = vadd.f32 %v977, %v1011
        %1013 = vmatmul.f32.gmra.mxu0 %v304
        %v1014 = vpop.f32.mrf.mxu0
        %v1015 = vadd.f32 %v980, %v1014
        %1016 = vdwg.mxu0
        %1017 = vmatpush.msra.mxu0 %v561
        %1018 = vmatpush.msra.mxu0 %v557
        %1019 = vmatpush.msra.mxu0 %v553
        %1020 = vmatpush.msra.mxu0 %v549
        %1021 = vmatpush.msra.mxu0 %v545
        %1022 = vmatpush.msra.mxu0 %v541
        %1023 = vmatpush.msra.mxu0 %v537
        %1024 = vmatpush.msra.mxu0 %v533
        %1025 = vmatpush.msra.mxu0 %v529
        %1026 = vmatpush.msra.mxu0 %v525
        %1027 = vmatpush.msra.mxu0 %v521
        %1028 = vmatpush.msra.mxu0 %v517
        %1029 = vmatpush.msra.mxu0 %v513
        %1030 = vmatpush.msra.mxu0 %v509
        %1031 = vmatpush.msra.mxu0 %v505
        %1032 = vmatpush.msra.mxu0 %v501
        %1033 = vmatmul.f32.gmra.mxu0 %v275
        %v1034 = vpop.f32.mrf.mxu0
        %v1035 = vadd.f32 %v1000, %v1034
        %1036 = vmatmul.f32.gmra.mxu0 %v281
        %v1037 = vpop.f32.mrf.mxu0
        %v1038 = vadd.f32 %v1003, %v1037
        %1039 = vmatmul.f32.gmra.mxu0 %v287
        %v1040 = vpop.f32.mrf.mxu0
        %v1041 = vadd.f32 %v1006, %v1040
        %1042 = vmatmul.f32.gmra.mxu0 %v293
        %v1043 = vpop.f32.mrf.mxu0
        %v1044 = vadd.f32 %v1009, %v1043
        %1045 = vmatmul.f32.gmra.mxu0 %v299
        %v1046 = vpop.f32.mrf.mxu0
        %v1047 = vadd.f32 %v1012, %v1046
        %1048 = vmatmul.f32.gmra.mxu0 %v305
        %v1049 = vpop.f32.mrf.mxu0
        %v1050 = vadd.f32 %v1015, %v1049
        %1051 = vdwg.mxu0
        %1052 = vmatpush.msra.mxu0 %v625
        %1053 = vmatpush.msra.mxu0 %v621
        %1054 = vmatpush.msra.mxu0 %v617
        %1055 = vmatpush.msra.mxu0 %v613
        %1056 = vmatpush.msra.mxu0 %v609
        %1057 = vmatpush.msra.mxu0 %v605
        %1058 = vmatpush.msra.mxu0 %v601
        %1059 = vmatpush.msra.mxu0 %v597
        %1060 = vmatpush.msra.mxu0 %v593
        %1061 = vmatpush.msra.mxu0 %v589
        %1062 = vmatpush.msra.mxu0 %v585
        %1063 = vmatpush.msra.mxu0 %v581
        %1064 = vmatpush.msra.mxu0 %v577
        %1065 = vmatpush.msra.mxu0 %v573
        %1066 = vmatpush.msra.mxu0 %v569
        %1067 = vmatpush.msra.mxu0 %v565
        %1068 = vmatmul.f32.gmra.mxu0 %v276
        %v1069 = vpop.f32.mrf.mxu0
        %v1070 = vadd.f32 %v1035, %v1069
        %1071 = vmatmul.f32.gmra.mxu0 %v282
        %v1072 = vpop.f32.mrf.mxu0
        %v1073 = vadd.f32 %v1038, %v1072
        %1074 = vmatmul.f32.gmra.mxu0 %v288
        %v1075 = vpop.f32.mrf.mxu0
        %v1076 = vadd.f32 %v1041, %v1075
        %1077 = vmatmul.f32.gmra.mxu0 %v294
        %v1078 = vpop.f32.mrf.mxu0
        %v1079 = vadd.f32 %v1044, %v1078
        %1080 = vmatmul.f32.gmra.mxu0 %v300
        %v1081 = vpop.f32.mrf.mxu0
        %v1082 = vadd.f32 %v1047, %v1081
        %1083 = vmatmul.f32.gmra.mxu0 %v306
        %v1084 = vpop.f32.mrf.mxu0
        %v1085 = vadd.f32 %v1050, %v1084
        %1086 = vdwg.mxu0
        %1087 = vmatpush.msra.mxu0 %v689
        %1088 = vmatpush.msra.mxu0 %v685
        %1089 = vmatpush.msra.mxu0 %v681
        %1090 = vmatpush.msra.mxu0 %v677
        %1091 = vmatpush.msra.mxu0 %v673
        %1092 = vmatpush.msra.mxu0 %v669
        %1093 = vmatpush.msra.mxu0 %v665
        %1094 = vmatpush.msra.mxu0 %v661
        %1095 = vmatpush.msra.mxu0 %v657
        %1096 = vmatpush.msra.mxu0 %v653
        %1097 = vmatpush.msra.mxu0 %v649
        %1098 = vmatpush.msra.mxu0 %v645
        %1099 = vmatpush.msra.mxu0 %v641
        %1100 = vmatpush.msra.mxu0 %v637
        %1101 = vmatpush.msra.mxu0 %v633
        %1102 = vmatpush.msra.mxu0 %v629
        %1103 = vmatmul.f32.gmra.mxu0 %v277
        %v1104 = vpop.f32.mrf.mxu0
        %v1105 = vadd.f32 %v1070, %v1104
        %1106 = vmatmul.f32.gmra.mxu0 %v283
        %v1107 = vpop.f32.mrf.mxu0
        %v1108 = vadd.f32 %v1073, %v1107
        %1109 = vmatmul.f32.gmra.mxu0 %v289
        %v1110 = vpop.f32.mrf.mxu0
        %v1111 = vadd.f32 %v1076, %v1110
        %1112 = vmatmul.f32.gmra.mxu0 %v295
        %v1113 = vpop.f32.mrf.mxu0
        %v1114 = vadd.f32 %v1079, %v1113
        %1115 = vmatmul.f32.gmra.mxu0 %v301
        %v1116 = vpop.f32.mrf.mxu0
        %v1117 = vadd.f32 %v1082, %v1116
        %1118 = vmatmul.f32.gmra.mxu0 %v307
        %v1119 = vpop.f32.mrf.mxu0
        %v1120 = vadd.f32 %v1085, %v1119
        %1121 = vdwg.mxu0
        %1122 = vmatpush.msra.mxu0 %v370
        %1123 = vmatpush.msra.mxu0 %v366
        %1124 = vmatpush.msra.mxu0 %v362
        %1125 = vmatpush.msra.mxu0 %v358
        %1126 = vmatpush.msra.mxu0 %v354
        %1127 = vmatpush.msra.mxu0 %v350
        %1128 = vmatpush.msra.mxu0 %v346
        %1129 = vmatpush.msra.mxu0 %v342
        %1130 = vmatpush.msra.mxu0 %v338
        %1131 = vmatpush.msra.mxu0 %v334
        %1132 = vmatpush.msra.mxu0 %v330
        %1133 = vmatpush.msra.mxu0 %v326
        %1134 = vmatpush.msra.mxu0 %v322
        %1135 = vmatpush.msra.mxu0 %v318
        %1136 = vmatpush.msra.mxu0 %v314
        %1137 = vmatpush.msra.mxu0 %v310
        %1138 = vmatmul.f32.gmra.mxu0 %v272
        %v1139 = vpop.f32.mrf.mxu0
        %v1140 = vadd.f32 %v696, %v1139
        %1141 = vmatmul.f32.gmra.mxu0 %v278
        %v1142 = vpop.f32.mrf.mxu0
        %v1143 = vadd.f32 %v696, %v1142
        %1144 = vmatmul.f32.gmra.mxu0 %v284
        %v1145 = vpop.f32.mrf.mxu0
        %v1146 = vadd.f32 %v696, %v1145
        %1147 = vmatmul.f32.gmra.mxu0 %v290
        %v1148 = vpop.f32.mrf.mxu0
        %v1149 = vadd.f32 %v696, %v1148
        %1150 = vmatmul.f32.gmra.mxu0 %v296
        %v1151 = vpop.f32.mrf.mxu0
        %v1152 = vadd.f32 %v696, %v1151
        %1153 = vmatmul.f32.gmra.mxu0 %v302
        %v1154 = vpop.f32.mrf.mxu0
        %v1155 = vadd.f32 %v696, %v1154
        %1156 = vdwg.mxu0
        %1157 = vmatpush.msra.mxu0 %v434
        %1158 = vmatpush.msra.mxu0 %v430
        %1159 = vmatpush.msra.mxu0 %v426
        %1160 = vmatpush.msra.mxu0 %v422
        %1161 = vmatpush.msra.mxu0 %v418
        %1162 = vmatpush.msra.mxu0 %v414
        %1163 = vmatpush.msra.mxu0 %v410
        %1164 = vmatpush.msra.mxu0 %v406
        %1165 = vmatpush.msra.mxu0 %v402
        %1166 = vmatpush.msra.mxu0 %v398
        %1167 = vmatpush.msra.mxu0 %v394
        %1168 = vmatpush.msra.mxu0 %v390
        %1169 = vmatpush.msra.mxu0 %v386
        %1170 = vmatpush.msra.mxu0 %v382
        %1171 = vmatpush.msra.mxu0 %v378
        %1172 = vmatpush.msra.mxu0 %v374
        %1173 = vmatmul.f32.gmra.mxu0 %v273
        %v1174 = vpop.f32.mrf.mxu0
        %v1175 = vadd.f32 %v1140, %v1174
        %1176 = vmatmul.f32.gmra.mxu0 %v279
        %v1177 = vpop.f32.mrf.mxu0
        %v1178 = vadd.f32 %v1143, %v1177
        %1179 = vmatmul.f32.gmra.mxu0 %v285
        %v1180 = vpop.f32.mrf.mxu0
        %v1181 = vadd.f32 %v1146, %v1180
        %1182 = vmatmul.f32.gmra.mxu0 %v291
        %v1183 = vpop.f32.mrf.mxu0
        %v1184 = vadd.f32 %v1149, %v1183
        %1185 = vmatmul.f32.gmra.mxu0 %v297
        %v1186 = vpop.f32.mrf.mxu0
        %v1187 = vadd.f32 %v1152, %v1186
        %1188 = vmatmul.f32.gmra.mxu0 %v303
        %v1189 = vpop.f32.mrf.mxu0
        %v1190 = vadd.f32 %v1155, %v1189
        %1191 = vdwg.mxu0
        %1192 = vmatpush.msra.mxu0 %v498
        %1193 = vmatpush.msra.mxu0 %v494
        %1194 = vmatpush.msra.mxu0 %v490
        %1195 = vmatpush.msra.mxu0 %v486
        %1196 = vmatpush.msra.mxu0 %v482
        %1197 = vmatpush.msra.mxu0 %v478
        %1198 = vmatpush.msra.mxu0 %v474
        %1199 = vmatpush.msra.mxu0 %v470
        %1200 = vmatpush.msra.mxu0 %v466
        %1201 = vmatpush.msra.mxu0 %v462
        %1202 = vmatpush.msra.mxu0 %v458
        %1203 = vmatpush.msra.mxu0 %v454
        %1204 = vmatpush.msra.mxu0 %v450
        %1205 = vmatpush.msra.mxu0 %v446
        %1206 = vmatpush.msra.mxu0 %v442
        %1207 = vmatpush.msra.mxu0 %v438
        %1208 = vmatmul.f32.gmra.mxu0 %v274
        %v1209 = vpop.f32.mrf.mxu0
        %v1210 = vadd.f32 %v1175, %v1209
        %1211 = vmatmul.f32.gmra.mxu0 %v280
        %v1212 = vpop.f32.mrf.mxu0
        %v1213 = vadd.f32 %v1178, %v1212
        %1214 = vmatmul.f32.gmra.mxu0 %v286
        %v1215 = vpop.f32.mrf.mxu0
        %v1216 = vadd.f32 %v1181, %v1215
        %1217 = vmatmul.f32.gmra.mxu0 %v292
        %v1218 = vpop.f32.mrf.mxu0
        %v1219 = vadd.f32 %v1184, %v1218
        %1220 = vmatmul.f32.gmra.mxu0 %v298
        %v1221 = vpop.f32.mrf.mxu0
        %v1222 = vadd.f32 %v1187, %v1221
        %1223 = vmatmul.f32.gmra.mxu0 %v304
        %v1224 = vpop.f32.mrf.mxu0
        %v1225 = vadd.f32 %v1190, %v1224
        %1226 = vdwg.mxu0
        %1227 = vmatpush.msra.mxu0 %v562
        %1228 = vmatpush.msra.mxu0 %v558
        %1229 = vmatpush.msra.mxu0 %v554
        %1230 = vmatpush.msra.mxu0 %v550
        %1231 = vmatpush.msra.mxu0 %v546
        %1232 = vmatpush.msra.mxu0 %v542
        %1233 = vmatpush.msra.mxu0 %v538
        %1234 = vmatpush.msra.mxu0 %v534
        %1235 = vmatpush.msra.mxu0 %v530
        %1236 = vmatpush.msra.mxu0 %v526
        %1237 = vmatpush.msra.mxu0 %v522
        %1238 = vmatpush.msra.mxu0 %v518
        %1239 = vmatpush.msra.mxu0 %v514
        %1240 = vmatpush.msra.mxu0 %v510
        %1241 = vmatpush.msra.mxu0 %v506
        %1242 = vmatpush.msra.mxu0 %v502
        %1243 = vmatmul.f32.gmra.mxu0 %v275
        %v1244 = vpop.f32.mrf.mxu0
        %v1245 = vadd.f32 %v1210, %v1244
        %1246 = vmatmul.f32.gmra.mxu0 %v281
        %v1247 = vpop.f32.mrf.mxu0
        %v1248 = vadd.f32 %v1213, %v1247
        %1249 = vmatmul.f32.gmra.mxu0 %v287
        %v1250 = vpop.f32.mrf.mxu0
        %v1251 = vadd.f32 %v1216, %v1250
        %1252 = vmatmul.f32.gmra.mxu0 %v293
        %v1253 = vpop.f32.mrf.mxu0
        %v1254 = vadd.f32 %v1219, %v1253
        %1255 = vmatmul.f32.gmra.mxu0 %v299
        %v1256 = vpop.f32.mrf.mxu0
        %v1257 = vadd.f32 %v1222, %v1256
        %1258 = vmatmul.f32.gmra.mxu0 %v305
        %v1259 = vpop.f32.mrf.mxu0
        %v1260 = vadd.f32 %v1225, %v1259
        %1261 = vdwg.mxu0
        %1262 = vmatpush.msra.mxu0 %v626
        %1263 = vmatpush.msra.mxu0 %v622
        %1264 = vmatpush.msra.mxu0 %v618
        %1265 = vmatpush.msra.mxu0 %v614
        %1266 = vmatpush.msra.mxu0 %v610
        %1267 = vmatpush.msra.mxu0 %v606
        %1268 = vmatpush.msra.mxu0 %v602
        %1269 = vmatpush.msra.mxu0 %v598
        %1270 = vmatpush.msra.mxu0 %v594
        %1271 = vmatpush.msra.mxu0 %v590
        %1272 = vmatpush.msra.mxu0 %v586
        %1273 = vmatpush.msra.mxu0 %v582
        %1274 = vmatpush.msra.mxu0 %v578
        %1275 = vmatpush.msra.mxu0 %v574
        %1276 = vmatpush.msra.mxu0 %v570
        %1277 = vmatpush.msra.mxu0 %v566
        %1278 = vmatmul.f32.gmra.mxu0 %v276
        %v1279 = vpop.f32.mrf.mxu0
        %v1280 = vadd.f32 %v1245, %v1279
        %1281 = vmatmul.f32.gmra.mxu0 %v282
        %v1282 = vpop.f32.mrf.mxu0
        %v1283 = vadd.f32 %v1248, %v1282
        %1284 = vmatmul.f32.gmra.mxu0 %v288
        %v1285 = vpop.f32.mrf.mxu0
        %v1286 = vadd.f32 %v1251, %v1285
        %1287 = vmatmul.f32.gmra.mxu0 %v294
        %v1288 = vpop.f32.mrf.mxu0
        %v1289 = vadd.f32 %v1254, %v1288
        %1290 = vmatmul.f32.gmra.mxu0 %v300
        %v1291 = vpop.f32.mrf.mxu0
        %v1292 = vadd.f32 %v1257, %v1291
        %1293 = vmatmul.f32.gmra.mxu0 %v306
        %v1294 = vpop.f32.mrf.mxu0
        %v1295 = vadd.f32 %v1260, %v1294
        %1296 = vdwg.mxu0
        %1297 = vmatpush.msra.mxu0 %v690
        %1298 = vmatpush.msra.mxu0 %v686
        %1299 = vmatpush.msra.mxu0 %v682
        %1300 = vmatpush.msra.mxu0 %v678
        %1301 = vmatpush.msra.mxu0 %v674
        %1302 = vmatpush.msra.mxu0 %v670
        %1303 = vmatpush.msra.mxu0 %v666
        %1304 = vmatpush.msra.mxu0 %v662
        %1305 = vmatpush.msra.mxu0 %v658
        %1306 = vmatpush.msra.mxu0 %v654
        %1307 = vmatpush.msra.mxu0 %v650
        %1308 = vmatpush.msra.mxu0 %v646
        %1309 = vmatpush.msra.mxu0 %v642
        %1310 = vmatpush.msra.mxu0 %v638
        %1311 = vmatpush.msra.mxu0 %v634
        %1312 = vmatpush.msra.mxu0 %v630
        %1313 = vmatmul.f32.gmra.mxu0 %v277
        %v1314 = vpop.f32.mrf.mxu0
        %v1315 = vadd.f32 %v1280, %v1314
        %1316 = vmatmul.f32.gmra.mxu0 %v283
        %v1317 = vpop.f32.mrf.mxu0
        %v1318 = vadd.f32 %v1283, %v1317
        %1319 = vmatmul.f32.gmra.mxu0 %v289
        %v1320 = vpop.f32.mrf.mxu0
        %v1321 = vadd.f32 %v1286, %v1320
        %1322 = vmatmul.f32.gmra.mxu0 %v295
        %v1323 = vpop.f32.mrf.mxu0
        %v1324 = vadd.f32 %v1289, %v1323
        %1325 = vmatmul.f32.gmra.mxu0 %v301
        %v1326 = vpop.f32.mrf.mxu0
        %v1327 = vadd.f32 %v1292, %v1326
        %1328 = vmatmul.f32.gmra.mxu0 %v307
        %v1329 = vpop.f32.mrf.mxu0
        %v1330 = vadd.f32 %v1295, %v1329
        %1331 = vdwg.mxu0
        %1332 = vmatpush.msra.mxu0 %v371
        %1333 = vmatpush.msra.mxu0 %v367
        %1334 = vmatpush.msra.mxu0 %v363
        %1335 = vmatpush.msra.mxu0 %v359
        %1336 = vmatpush.msra.mxu0 %v355
        %1337 = vmatpush.msra.mxu0 %v351
        %1338 = vmatpush.msra.mxu0 %v347
        %1339 = vmatpush.msra.mxu0 %v343
        %1340 = vmatpush.msra.mxu0 %v339
        %1341 = vmatpush.msra.mxu0 %v335
        %1342 = vmatpush.msra.mxu0 %v331
        %1343 = vmatpush.msra.mxu0 %v327
        %1344 = vmatpush.msra.mxu0 %v323
        %1345 = vmatpush.msra.mxu0 %v319
        %1346 = vmatpush.msra.mxu0 %v315
        %1347 = vmatpush.msra.mxu0 %v311
        %1348 = vmatmul.f32.gmra.mxu0 %v272
        %v1349 = vpop.f32.mrf.mxu0
        %v1350 = vadd.f32 %v697, %v1349
        %1351 = vmatmul.f32.gmra.mxu0 %v278
        %v1352 = vpop.f32.mrf.mxu0
        %v1353 = vadd.f32 %v697, %v1352
        %1354 = vmatmul.f32.gmra.mxu0 %v284
        %v1355 = vpop.f32.mrf.mxu0
        %v1356 = vadd.f32 %v697, %v1355
        %1357 = vmatmul.f32.gmra.mxu0 %v290
        %v1358 = vpop.f32.mrf.mxu0
        %v1359 = vadd.f32 %v697, %v1358
        %1360 = vmatmul.f32.gmra.mxu0 %v296
        %v1361 = vpop.f32.mrf.mxu0
        %v1362 = vadd.f32 %v697, %v1361
        %1363 = vmatmul.f32.gmra.mxu0 %v302
        %v1364 = vpop.f32.mrf.mxu0
        %v1365 = vadd.f32 %v697, %v1364
        %1366 = vdwg.mxu0
        %1367 = vmatpush.msra.mxu0 %v435
        %1368 = vmatpush.msra.mxu0 %v431
        %1369 = vmatpush.msra.mxu0 %v427
        %1370 = vmatpush.msra.mxu0 %v423
        %1371 = vmatpush.msra.mxu0 %v419
        %1372 = vmatpush.msra.mxu0 %v415
        %1373 = vmatpush.msra.mxu0 %v411
        %1374 = vmatpush.msra.mxu0 %v407
        %1375 = vmatpush.msra.mxu0 %v403
        %1376 = vmatpush.msra.mxu0 %v399
        %1377 = vmatpush.msra.mxu0 %v395
        %1378 = vmatpush.msra.mxu0 %v391
        %1379 = vmatpush.msra.mxu0 %v387
        %1380 = vmatpush.msra.mxu0 %v383
        %1381 = vmatpush.msra.mxu0 %v379
        %1382 = vmatpush.msra.mxu0 %v375
        %1383 = vmatmul.f32.gmra.mxu0 %v273
        %v1384 = vpop.f32.mrf.mxu0
        %v1385 = vadd.f32 %v1350, %v1384
        %1386 = vmatmul.f32.gmra.mxu0 %v279
        %v1387 = vpop.f32.mrf.mxu0
        %v1388 = vadd.f32 %v1353, %v1387
        %1389 = vmatmul.f32.gmra.mxu0 %v285
        %v1390 = vpop.f32.mrf.mxu0
        %v1391 = vadd.f32 %v1356, %v1390
        %1392 = vmatmul.f32.gmra.mxu0 %v291
        %v1393 = vpop.f32.mrf.mxu0
        %v1394 = vadd.f32 %v1359, %v1393
        %1395 = vmatmul.f32.gmra.mxu0 %v297
        %v1396 = vpop.f32.mrf.mxu0
        %v1397 = vadd.f32 %v1362, %v1396
        %1398 = vmatmul.f32.gmra.mxu0 %v303
        %v1399 = vpop.f32.mrf.mxu0
        %v1400 = vadd.f32 %v1365, %v1399
        %1401 = vdwg.mxu0
        %1402 = vmatpush.msra.mxu0 %v499
        %1403 = vmatpush.msra.mxu0 %v495
        %1404 = vmatpush.msra.mxu0 %v491
        %1405 = vmatpush.msra.mxu0 %v487
        %1406 = vmatpush.msra.mxu0 %v483
        %1407 = vmatpush.msra.mxu0 %v479
        %1408 = vmatpush.msra.mxu0 %v475
        %1409 = vmatpush.msra.mxu0 %v471
        %1410 = vmatpush.msra.mxu0 %v467
        %1411 = vmatpush.msra.mxu0 %v463
        %1412 = vmatpush.msra.mxu0 %v459
        %1413 = vmatpush.msra.mxu0 %v455
        %1414 = vmatpush.msra.mxu0 %v451
        %1415 = vmatpush.msra.mxu0 %v447
        %1416 = vmatpush.msra.mxu0 %v443
        %1417 = vmatpush.msra.mxu0 %v439
        %1418 = vmatmul.f32.gmra.mxu0 %v274
        %v1419 = vpop.f32.mrf.mxu0
        %v1420 = vadd.f32 %v1385, %v1419
        %1421 = vmatmul.f32.gmra.mxu0 %v280
        %v1422 = vpop.f32.mrf.mxu0
        %v1423 = vadd.f32 %v1388, %v1422
        %1424 = vmatmul.f32.gmra.mxu0 %v286
        %v1425 = vpop.f32.mrf.mxu0
        %v1426 = vadd.f32 %v1391, %v1425
        %1427 = vmatmul.f32.gmra.mxu0 %v292
        %v1428 = vpop.f32.mrf.mxu0
        %v1429 = vadd.f32 %v1394, %v1428
        %1430 = vmatmul.f32.gmra.mxu0 %v298
        %v1431 = vpop.f32.mrf.mxu0
        %v1432 = vadd.f32 %v1397, %v1431
        %1433 = vmatmul.f32.gmra.mxu0 %v304
        %v1434 = vpop.f32.mrf.mxu0
        %v1435 = vadd.f32 %v1400, %v1434
        %1436 = vdwg.mxu0
        %1437 = vmatpush.msra.mxu0 %v563
        %1438 = vmatpush.msra.mxu0 %v559
        %1439 = vmatpush.msra.mxu0 %v555
        %1440 = vmatpush.msra.mxu0 %v551
        %1441 = vmatpush.msra.mxu0 %v547
        %1442 = vmatpush.msra.mxu0 %v543
        %1443 = vmatpush.msra.mxu0 %v539
        %1444 = vmatpush.msra.mxu0 %v535
        %1445 = vmatpush.msra.mxu0 %v531
        %1446 = vmatpush.msra.mxu0 %v527
        %1447 = vmatpush.msra.mxu0 %v523
        %1448 = vmatpush.msra.mxu0 %v519
        %1449 = vmatpush.msra.mxu0 %v515
        %1450 = vmatpush.msra.mxu0 %v511
        %1451 = vmatpush.msra.mxu0 %v507
        %1452 = vmatpush.msra.mxu0 %v503
        %1453 = vmatmul.f32.gmra.mxu0 %v275
        %v1454 = vpop.f32.mrf.mxu0
        %v1455 = vadd.f32 %v1420, %v1454
        %1456 = vmatmul.f32.gmra.mxu0 %v281
        %v1457 = vpop.f32.mrf.mxu0
        %v1458 = vadd.f32 %v1423, %v1457
        %1459 = vmatmul.f32.gmra.mxu0 %v287
        %v1460 = vpop.f32.mrf.mxu0
        %v1461 = vadd.f32 %v1426, %v1460
        %1462 = vmatmul.f32.gmra.mxu0 %v293
        %v1463 = vpop.f32.mrf.mxu0
        %v1464 = vadd.f32 %v1429, %v1463
        %1465 = vmatmul.f32.gmra.mxu0 %v299
        %v1466 = vpop.f32.mrf.mxu0
        %v1467 = vadd.f32 %v1432, %v1466
        %1468 = vmatmul.f32.gmra.mxu0 %v305
        %v1469 = vpop.f32.mrf.mxu0
        %v1470 = vadd.f32 %v1435, %v1469
        %1471 = vdwg.mxu0
        %1472 = vmatpush.msra.mxu0 %v627
        %1473 = vmatpush.msra.mxu0 %v623
        %1474 = vmatpush.msra.mxu0 %v619
        %1475 = vmatpush.msra.mxu0 %v615
        %1476 = vmatpush.msra.mxu0 %v611
        %1477 = vmatpush.msra.mxu0 %v607
        %1478 = vmatpush.msra.mxu0 %v603
        %1479 = vmatpush.msra.mxu0 %v599
        %1480 = vmatpush.msra.mxu0 %v595
        %1481 = vmatpush.msra.mxu0 %v591
        %1482 = vmatpush.msra.mxu0 %v587
        %1483 = vmatpush.msra.mxu0 %v583
        %1484 = vmatpush.msra.mxu0 %v579
        %1485 = vmatpush.msra.mxu0 %v575
        %1486 = vmatpush.msra.mxu0 %v571
        %1487 = vmatpush.msra.mxu0 %v567
        %1488 = vmatmul.f32.gmra.mxu0 %v276
        %v1489 = vpop.f32.mrf.mxu0
        %v1490 = vadd.f32 %v1455, %v1489
        %1491 = vmatmul.f32.gmra.mxu0 %v282
        %v1492 = vpop.f32.mrf.mxu0
        %v1493 = vadd.f32 %v1458, %v1492
        %1494 = vmatmul.f32.gmra.mxu0 %v288
        %v1495 = vpop.f32.mrf.mxu0
        %v1496 = vadd.f32 %v1461, %v1495
        %1497 = vmatmul.f32.gmra.mxu0 %v294
        %v1498 = vpop.f32.mrf.mxu0
        %v1499 = vadd.f32 %v1464, %v1498
        %1500 = vmatmul.f32.gmra.mxu0 %v300
        %v1501 = vpop.f32.mrf.mxu0
        %v1502 = vadd.f32 %v1467, %v1501
        %1503 = vmatmul.f32.gmra.mxu0 %v306
        %v1504 = vpop.f32.mrf.mxu0
        %v1505 = vadd.f32 %v1470, %v1504
        %1506 = vdwg.mxu0
        %1507 = vmatpush.msra.mxu0 %v691
        %1508 = vmatpush.msra.mxu0 %v687
        %1509 = vmatpush.msra.mxu0 %v683
        %1510 = vmatpush.msra.mxu0 %v679
        %1511 = vmatpush.msra.mxu0 %v675
        %1512 = vmatpush.msra.mxu0 %v671
        %1513 = vmatpush.msra.mxu0 %v667
        %1514 = vmatpush.msra.mxu0 %v663
        %1515 = vmatpush.msra.mxu0 %v659
        %1516 = vmatpush.msra.mxu0 %v655
        %1517 = vmatpush.msra.mxu0 %v651
        %1518 = vmatpush.msra.mxu0 %v647
        %1519 = vmatpush.msra.mxu0 %v643
        %1520 = vmatpush.msra.mxu0 %v639
        %1521 = vmatpush.msra.mxu0 %v635
        %1522 = vmatpush.msra.mxu0 %v631
        %1523 = vmatmul.f32.gmra.mxu0 %v277
        %v1524 = vpop.f32.mrf.mxu0
        %v1525 = vadd.f32 %v1490, %v1524
        %1526 = vmatmul.f32.gmra.mxu0 %v283
        %v1527 = vpop.f32.mrf.mxu0
        %v1528 = vadd.f32 %v1493, %v1527
        %1529 = vmatmul.f32.gmra.mxu0 %v289
        %v1530 = vpop.f32.mrf.mxu0
        %v1531 = vadd.f32 %v1496, %v1530
        %1532 = vmatmul.f32.gmra.mxu0 %v295
        %v1533 = vpop.f32.mrf.mxu0
        %v1534 = vadd.f32 %v1499, %v1533
        %1535 = vmatmul.f32.gmra.mxu0 %v301
        %v1536 = vpop.f32.mrf.mxu0
        %v1537 = vadd.f32 %v1502, %v1536
        %1538 = vmatmul.f32.gmra.mxu0 %v307
        %v1539 = vpop.f32.mrf.mxu0
        %v1540 = vadd.f32 %v1505, %v1539
        %1541 = vdwg.mxu0
        %1542 = vst [vmem:[%s266] sm:$0xff] %v895
        %1543 = vst [vmem:[%s266 + $0x8] sm:$0xff] %v1105
        %1544 = vst [vmem:[%s266 + $0x10] sm:$0xff] %v1315
        %1545 = vst [vmem:[%s266 + $0x18] sm:$0xff] %v1525
        %1546 = vst [vmem:[%s266 + $0x20] sm:$0xff] %v898
        %1547 = vst [vmem:[%s266 + $0x28] sm:$0xff] %v1108
        %1548 = vst [vmem:[%s266 + $0x30] sm:$0xff] %v1318
        %1549 = vst [vmem:[%s266 + $0x38] sm:$0xff] %v1528
        %1550 = vst [vmem:[%s266 + $0x40] sm:$0xff] %v901
        %1551 = vst [vmem:[%s266 + $0x48] sm:$0xff] %v1111
        %1552 = vst [vmem:[%s266 + $0x50] sm:$0xff] %v1321
        %1553 = vst [vmem:[%s266 + $0x58] sm:$0xff] %v1531
        %1554 = vst [vmem:[%s266 + $0x60] sm:$0xff] %v904
        %1555 = vst [vmem:[%s266 + $0x68] sm:$0xff] %v1114
        %1556 = vst [vmem:[%s266 + $0x70] sm:$0xff] %v1324
        %1557 = vst [vmem:[%s266 + $0x78] sm:$0xff] %v1534
        %1558 = vst [vmem:[%s266 + $0x80] sm:$0xff] %v907
        %1559 = vst [vmem:[%s266 + $0x88] sm:$0xff] %v1117
        %1560 = vst [vmem:[%s266 + $0x90] sm:$0xff] %v1327
        %1561 = vst [vmem:[%s266 + $0x98] sm:$0xff] %v1537
        %1562 = vst [vmem:[%s266 + $0xa0] sm:$0xff] %v910
        %1563 = vst [vmem:[%s266 + $0xa8] sm:$0xff] %v1120
        %1564 = vst [vmem:[%s266 + $0xb0] sm:$0xff] %v1330
        %1565 = vst [vmem:[%s266 + $0xb8] sm:$0xff] %v1540
        %s1566 = sand.u32 %s121, 1
        %s1567 = scalar_lea.sflag [#allocation4], %s1566
        %s1568 = sand.u32 %s121, 1
        %s1569 = smul.addr %s1568, 192
        %s1570 = scalar_lea.vmem [#allocation8], %s1569
        // Predicated region
        $region45: #{tpu_custom_call.1} parent=31 // pred_check
          %p1571 = pneg %p131
        $region46: #{tpu_custom_call.1} parent=31 // pred_check_branch
          %1573 = sbr.rel (%p1571) target = $region48
        $region47: #{tpu_custom_call.1} parent=31 // pred_region
          %s1574 = smul.u32 6, %s26
          %s1575 = smul.u32 4, %s25
          %1577 = vsyncadd %s1567, 0
          %s1578 = smul.addr %s1574, 16
          %s1579 = sadd.s32 %s1575, %s1578
          %s1580 = smul.addr %s1579, 8
          %s1581 = scalar_lea.hbm %s3, %s1580
          %s1582 = sshll.u32 %s1570, 4
          %s1583 = int_to_ptr.vmem [resolvable:$true] %s1582
          %s1584 = sshll.u32 %s1581, 4
          %s1585 = int_to_ptr.hbm [resolvable:$true] %s1584
          %1590 = dma.vmem_to_hbm [thread:$0]  %s1583, 3072, %s1585, %s1567, 512, 2048, 32
        $region48: #{tpu_custom_call.1} parent=31 // pred_fallthru
          _
      $region32: #{tpu_custom_call.1} parent=5 // pred_fallthru
        _
      %p1591 = scmp.le.s32.totalorder 2, %s16
      // Predicated region
      $region49: #{tpu_custom_call.1} parent=5 // pred_check
        %p1592 = pneg %p1591
      $region50: #{tpu_custom_call.1} parent=5 // pred_check_branch
        %1594 = sbr.rel (%p1592) target = $region52
      $region51: #{tpu_custom_call.1} parent=5 // pred_region
        %s1595 = ssub.s32 %s16, 2
        // Predicated region
        $region53: #{tpu_custom_call.1} parent=51 // pred_check
          %p1596 = pneg %p137
        $region54: #{tpu_custom_call.1} parent=51 // pred_check_branch
          %1598 = sbr.rel (%p1596) target = $region56
        $region55: #{tpu_custom_call.1} parent=51 // pred_region
          %s1599 = sand.u32 %s122, 1
          %s1600 = scalar_lea.sflag [#allocation4], %s1599
          %s1601 = sand.u32 %s122, 1
          %s1602 = smul.addr %s1601, 192
          %s1603 = scalar_lea.vmem [#allocation8], %s1602
          %1605 = dma.done %s1600, 3072
        $region56: #{tpu_custom_call.1} parent=51 // pred_fallthru
          _
      $region52: #{tpu_custom_call.1} parent=5 // pred_fallthru
        _
    $region6: #{tpu_custom_call.1} parent=1 // loop_footer
      %s20 = sadd.s32 1, %s16
    $region7: #{tpu_custom_call.1} parent=1 // loop_footer_branch
      %15 = sbr.rel target = $region3
    $region8: #{tpu_custom_call.1} parent=1 // loop_exit
      _
    %1606 = vsyncpa [#allocation3], 1
    %s1607 = scalar_lea.sflag [#allocation3], 1
    %1608 = vsyncpa %s1607, 1
    %1609 = vsyncpa [#allocation6], 1
    %s1610 = scalar_lea.sflag [#allocation6], 1
    %1611 = vsyncpa %s1610, 1
    %1612 = vsyncpa [#allocation4], 1
    %s1613 = scalar_lea.sflag [#allocation4], 1
    %1614 = vsyncpa %s1613, 1

</llo_original>
